<compile_context>
chip_gen: v7x
topology: tpu7x:2x2x1
jax: 0.10.0
libtpu: 0.0.40
codegen_flags: <defaults>
</compile_context>

<pallas_src>
import jax
import jax.numpy as jnp
from jax.experimental import pallas as pl
from jax.experimental.pallas import tpu as pltpu

N = 64            # total points: 2 graphs x 32 points
C = 4             # input feature channels
H1, H2 = 32, 64   # nn = MLP([C + 3, H1, H2]) with ReLU after each Linear
H2_PAD = 128      # lane-dense output width (zero-padded, sliced in wrapper)
RATIO = 0.5
R = 0.4
MAX_NEIGHBORS = 64

# Block sizes: targets split into 2 parallel blocks, sources into 2 reduction
# blocks. S_BLK * T_BLK = 1024 rows keeps the layer-2 MXU stream long.
T_BLK = 32
S_BLK = 32
T_BLOCKS = N // T_BLK
S_BLOCKS = N // S_BLK


# ---------------------------------------------------------------------------
# Pallas kernel: PointNetConv message MLP + masked max aggregation
# Grid: (target_block [parallel], source_block [arbitrary, reduction])
# ---------------------------------------------------------------------------
def pointnet_conv_kernel(x_ref, pos_s_ref, pos_t_ref, mask_ref,
                         w1x_ref, w1p_ref, b1_ref, w2_ref, b2_ref, o_ref):
    s_step = pl.program_id(1)

    # Output block is resident across the source axis; init once. h2 >= 0
    # (final ReLU) and empty targets must be 0, so a 0-initialized max
    # accumulator is exact.
    @pl.when(s_step == 0)
    def _():
        o_ref[...] = jnp.zeros_like(o_ref)

    # Layer 1, exploiting linearity of the position term (all f32):
    #   h1[s,t] = relu( x[s]@W1x + (pos[s]-pos[t])@W1p + b1 )
    #           = relu( s_part[s] - pw_t[t] )
    xw = jnp.dot(x_ref[...], w1x_ref[...],
                 preferred_element_type=jnp.float32)                 # (S_BLK, H1)
    pw_s = jnp.dot(pos_s_ref[...], w1p_ref[...],
                   preferred_element_type=jnp.float32)               # (S_BLK, H1)
    pw_t = jnp.dot(pos_t_ref[...], w1p_ref[...],
                   preferred_element_type=jnp.float32)               # (T_BLK, H1)
    s_part = xw + pw_s + b1_ref[...]                                 # (S_BLK, H1)
    h1 = jnp.maximum(s_part[:, None, :] - pw_t[None, :, :], 0.0)     # (S_BLK, T_BLK, H1)

    # Layer 2: bf16 operands at the MXU boundary only, f32 accumulation.
    # Leading-dim merge is layout-preserving (minor dim unchanged).
    h2 = jnp.dot(h1.astype(jnp.bfloat16).reshape(S_BLK * T_BLK, H1),
                 w2_ref[...],                                        # bf16 (H1, H2_PAD)
                 preferred_element_type=jnp.float32)                 # (S*T, H2_PAD) f32
    h2 = jnp.maximum(h2 + b2_ref[...], 0.0).reshape(S_BLK, T_BLK, H2_PAD)

    # Masked max aggregation over the LEADING (source) axis -> VPU accumulate.
    blk_max = jnp.max(h2 * mask_ref[...][:, :, None], axis=0)        # (T_BLK, H2_PAD)
    o_ref[...] = jnp.maximum(o_ref[...], blk_max)


def prepare_conv_params(w1, b1, w2, b2):
    """One-time parameter prep (hoisted out of the traced forward):
    split W1 into feature/position parts, zero-pad W2/b2 to a lane-dense 128
    columns, and cast W2 to bf16 for the MXU."""
    w1x = w1[:C].astype(jnp.float32)                       # (C, H1)
    w1p = w1[C:].astype(jnp.float32)                       # (3, H1)
    w2p = jnp.zeros((H1, H2_PAD), jnp.float32).at[:, :H2].set(w2)
    w2p = w2p.astype(jnp.bfloat16)                         # (H1, H2_PAD) bf16
    b2p = jnp.zeros((1, H2_PAD), jnp.float32).at[:, :H2].set(b2)
    return (w1x, w1p, b1.astype(jnp.float32), w2p, b2p)


def pointnet_conv(x, pos, mask_blocks, params):
    """mask_blocks: (T_BLOCKS, N_source, T_BLK) f32 edge mask (1.0 = edge)."""
    w1x, w1p, b1, w2p, b2p = params
    out = pl.pallas_call(
        pointnet_conv_kernel,
        out_shape=jax.ShapeDtypeStruct((N, H2_PAD), jnp.float32),
        grid_spec=pltpu.PrefetchScalarGridSpec(
            num_scalar_prefetch=0,
            grid=(T_BLOCKS, S_BLOCKS),
            in_specs=[
                pl.BlockSpec((S_BLK, C), lambda t, s: (s, 0)),          # x (sources)
                pl.BlockSpec((S_BLK, 3), lambda t, s: (s, 0)),          # pos (sources)
                pl.BlockSpec((T_BLK, 3), lambda t, s: (t, 0)),          # pos (targets)
                pl.BlockSpec((None, S_BLK, T_BLK), lambda t, s: (t, s, 0)),  # mask
                pl.BlockSpec((C, H1), lambda t, s: (0, 0)),             # W1[:C]
                pl.BlockSpec((3, H1), lambda t, s: (0, 0)),             # W1[C:]
                pl.BlockSpec((1, H1), lambda t, s: (0, 0)),             # b1
                pl.BlockSpec((H1, H2_PAD), lambda t, s: (0, 0)),        # W2 (bf16, padded)
                pl.BlockSpec((1, H2_PAD), lambda t, s: (0, 0)),         # b2 (padded)
            ],
            out_specs=pl.BlockSpec((T_BLK, H2_PAD), lambda t, s: (t, 0)),
        ),
        compiler_params=pltpu.CompilerParams(
            dimension_semantics=("parallel", "arbitrary"),
            vmem_limit_bytes=32 * 1024 * 1024,
        ),
    )(x, pos, pos, mask_blocks, w1x, w1p, b1, w2p, b2p)
    return out[:, :H2]


# ---------------------------------------------------------------------------
# Glue: farthest point sampling + radius neighbor search (plain JAX)
# ---------------------------------------------------------------------------
def fps_single(pos_g, num_samples):
    # TODO(synk): PyG fps uses a random start point by default; we start at
    # index 0 (equivalent to random_start=False) for determinism.
    n = pos_g.shape[0]
    idx = jnp.zeros((num_samples,), jnp.int32)
    dists = jnp.full((n,), jnp.inf, jnp.float32)

    def body(i, carry):
        idx, dists, last = carry
        d = jnp.sum((pos_g - pos_g[last]) ** 2, axis=-1)
        dists = jnp.minimum(dists, d)
        nxt = jnp.argmax(dists).astype(jnp.int32)
        idx = idx.at[i].set(nxt)
        return idx, dists, nxt

    idx, _, _ = jax.lax.fori_loop(1, num_samples, body,
                                  (idx, dists, jnp.int32(0)))
    return idx


def radius_mask_st(pos, batch, idx, r, max_neighbors=MAX_NEIGHBORS):
    """Dense (N_source, N_target) edge mask, emitted directly in the
    source-major orientation the kernel consumes. Targets 0..M-1 correspond to
    query points pos[idx]; targets M..N-1 have no edges (zero columns)."""
    # TODO(synk): torch_cluster keeps the first max_num_neighbors found by its
    # grid search; we keep the first by source index (never binds at N=64).
    q = pos[idx]                                                        # (M, 3)
    qb = batch[idx]                                                     # (M,)
    d2 = jnp.sum((pos[:, None, :] - q[None, :, :]) ** 2, axis=-1)       # (N, M)
    within = (d2 <= r * r) & (batch[:, None] == qb[None, :])
    cnt = jnp.cumsum(within.astype(jnp.int32), axis=0)                  # per-target cap
    within = within & (cnt <= max_neighbors)
    mask = jnp.zeros((pos.shape[0], pos.shape[0]), jnp.float32)
    mask = mask.at[:, : idx.shape[0]].set(within.astype(jnp.float32))
    return mask                                                         # (N_s, N_t)


def mask_to_target_blocks(mask_st):
    """(N_s, N_t) -> (T_BLOCKS, N_s, T_BLK) so each grid step DMAs a
    lane-aligned (S_BLK, T_BLK) mask tile (no in-kernel lane slicing)."""
    return mask_st.reshape(N, T_BLOCKS, T_BLK).transpose(1, 0, 2)


def sa_module_forward(x, pos, batch, params):
    # Two contiguous graphs of N//2 points each (matches `batch` below).
    n_per = N // 2
    m_per = int(n_per * RATIO)
    idx0 = fps_single(pos[:n_per], m_per)
    idx1 = fps_single(pos[n_per:], m_per) + n_per
    idx = jnp.concatenate([idx0, idx1], axis=0)
    mask_st = radius_mask_st(pos, batch, idx, R)
    x_out = pointnet_conv(x, pos, mask_to_target_blocks(mask_st), params)
    return x_out, pos, batch


# ---------------------------------------------------------------------------
# Pure-JAX f32 reference of the conv (for correctness check)
# ---------------------------------------------------------------------------
def conv_reference(x, pos, mask_st, w1, b1, w2, b2):
    rel = pos[:, None, :] - pos[None, :, :]                 # rel[s,t] = pos_s - pos_t
    h1 = jnp.maximum(
        jnp.einsum("sc,ch->sh", x, w1[:C])[:, None, :]
        + jnp.einsum("std,dh->sth", rel, w1[C:]) + b1, 0.0)
    h2 = jnp.maximum(jnp.einsum("sth,ho->sto", h1, w2) + b2, 0.0)
    masked = jnp.where(mask_st[:, :, None] > 0.0, h2, -1e30)
    mx = masked.max(axis=0)                                 # (N_t, H2)
    has = mask_st.sum(axis=0)[:, None] > 0.0
    return jnp.where(has, mx, 0.0)


if __name__ == "__main__":
    key = jax.random.PRNGKey(0)
    k1, k2, k3, k4, k5, k6 = jax.random.split(key, 6)

    pos = jax.random.uniform(k1, (N, 3), jnp.float32)
    x = jax.random.normal(k2, (N, C), jnp.float32)
    batch = jnp.concatenate(
        [jnp.zeros((N // 2,), jnp.int32), jnp.ones((N // 2,), jnp.int32)])

    # Deterministic params for nn = Linear(C+3, H1) -> ReLU -> Linear(H1, H2) -> ReLU
    w1 = jax.random.normal(k3, (C + 3, H1), jnp.float32) * 0.2
    b1 = jax.random.normal(k4, (1, H1), jnp.float32) * 0.1
    w2 = jax.random.normal(k5, (H1, H2), jnp.float32) * 0.2
    b2 = jax.random.normal(k6, (1, H2), jnp.float32) * 0.1
    params = prepare_conv_params(w1, b1, w2, b2)

    x_out, pos_out, batch_out = sa_module_forward(x, pos, batch, params)
    jax.block_until_ready(x_out)

    # Correctness check against the plain-JAX f32 reference. The kernel's
    # layer-2 matmul runs in bf16 (f32 accumulation), so tolerance is ~1e-2.
    n_per = N // 2
    m_per = int(n_per * RATIO)
    idx = jnp.concatenate(
        [fps_single(pos[:n_per], m_per), fps_single(pos[n_per:], m_per) + n_per])
    mask_st = radius_mask_st(pos, batch, idx, R)
    ref = conv_reference(x, pos, mask_st, w1, b1, w2, b2)

    assert x_out.shape == (N, H2)
    assert pos_out.shape == (N, 3) and batch_out.shape == (N,)
    assert jnp.allclose(x_out, ref, atol=2e-2, rtol=2e-2)
    print("KERNEL_OK")
</pallas_src>

<mosaic_0001>
module attributes {stable_mosaic.version = 11 : i64} {
  func.func @pointnet_conv_kernel(%arg0: i32, %arg1: i32, %arg2: memref<32x4xf32, #tpu.memory_space<vmem>>, %arg3: memref<32x3xf32, #tpu.memory_space<vmem>>, %arg4: memref<32x3xf32, #tpu.memory_space<vmem>>, %arg5: memref<1x32x32xf32, #tpu.memory_space<vmem>>, %arg6: memref<4x32xf32, #tpu.memory_space<vmem>>, %arg7: memref<3x32xf32, #tpu.memory_space<vmem>>, %arg8: memref<1x32xf32, #tpu.memory_space<vmem>>, %arg9: memref<32x128xbf16, #tpu.memory_space<vmem>>, %arg10: memref<1x128xf32, #tpu.memory_space<vmem>>, %arg11: memref<32x128xf32, #tpu.memory_space<vmem>>) attributes {dimension_semantics = [#tpu.dimension_semantics<parallel>, #tpu.dimension_semantics<arbitrary>], iteration_bounds = array<i64: 2, 2>, scalar_prefetch = 0 : i64, scratch_operands = 0 : i64, tpu.core_type = #tpu.core_type<tc>, window_params = [{transform_indices = @transform_0, window_bounds = array<i64: 32, 4>}, {transform_indices = @transform_1, window_bounds = array<i64: 32, 3>}, {transform_indices = @transform_2, window_bounds = array<i64: 32, 3>}, {transform_indices = @transform_3, window_bounds = array<i64: 1, 32, 32>}, {pipeline_mode = #tpu.pipeline_mode<synchronous>, transform_indices = @transform_4, window_bounds = array<i64: 4, 32>}, {pipeline_mode = #tpu.pipeline_mode<synchronous>, transform_indices = @transform_5, window_bounds = array<i64: 3, 32>}, {pipeline_mode = #tpu.pipeline_mode<synchronous>, transform_indices = @transform_6, window_bounds = array<i64: 1, 32>}, {pipeline_mode = #tpu.pipeline_mode<synchronous>, transform_indices = @transform_7, window_bounds = array<i64: 32, 128>}, {pipeline_mode = #tpu.pipeline_mode<synchronous>, transform_indices = @transform_8, window_bounds = array<i64: 1, 128>}, {transform_indices = @transform_9, window_bounds = array<i64: 32, 128>}]} {
    %c0_i32 = arith.constant 0 : i32
    %0 = arith.cmpi eq, %arg1, %c0_i32 : i32
    %1 = arith.extui %0 : i1 to i32
    %c0_i32_0 = arith.constant 0 : i32
    %2 = arith.cmpi ne, %1, %c0_i32_0 : i32
    scf.if %2 {
      %cst_31 = arith.constant 0.000000e+00 : f32
      %42 = vector.broadcast %cst_31 : f32 to vector<32x128xf32>
      %c0_32 = arith.constant 0 : index
      %c0_33 = arith.constant 0 : index
      %43 = vector.load %arg11[%c0_32, %c0_33] : memref<32x128xf32, #tpu.memory_space<vmem>>, vector<32x128xf32>
      tpu.vector_store %arg11[%c0_32, %c0_33], %42 {strides = array<i32>} : memref<32x128xf32, #tpu.memory_space<vmem>>, vector<32x128xf32>,
    } else {
    }
    %c0 = arith.constant 0 : index
    %c0_1 = arith.constant 0 : index
    %3 = vector.load %arg2[%c0, %c0_1] : memref<32x4xf32, #tpu.memory_space<vmem>>, vector<32x4xf32>
    %c0_2 = arith.constant 0 : index
    %c0_3 = arith.constant 0 : index
    %4 = vector.load %arg6[%c0_2, %c0_3] : memref<4x32xf32, #tpu.memory_space<vmem>>, vector<4x32xf32>
    %cst = arith.constant dense<0.000000e+00> : vector<32x32xf32>
    %5 = tpu.matmul %3, %4, %cst {dimension_numbers = #tpu.dot_dimension_numbers<[1], [0], [0], [1], [0, 0, 1, 1], [], []>} : vector<32x4xf32>, vector<4x32xf32>, vector<32x32xf32> -> vector<32x32xf32>
    %c0_4 = arith.constant 0 : index
    %c0_5 = arith.constant 0 : index
    %6 = vector.load %arg3[%c0_4, %c0_5] : memref<32x3xf32, #tpu.memory_space<vmem>>, vector<32x3xf32>
    %c0_6 = arith.constant 0 : index
    %c0_7 = arith.constant 0 : index
    %7 = vector.load %arg7[%c0_6, %c0_7] : memref<3x32xf32, #tpu.memory_space<vmem>>, vector<3x32xf32>
    %cst_8 = arith.constant dense<0.000000e+00> : vector<32x32xf32>
    %8 = tpu.matmul %6, %7, %cst_8 {dimension_numbers = #tpu.dot_dimension_numbers<[1], [0], [0], [1], [0, 0, 1, 1], [], []>} : vector<32x3xf32>, vector<3x32xf32>, vector<32x32xf32> -> vector<32x32xf32>
    %c0_9 = arith.constant 0 : index
    %c0_10 = arith.constant 0 : index
    %9 = vector.load %arg4[%c0_9, %c0_10] : memref<32x3xf32, #tpu.memory_space<vmem>>, vector<32x3xf32>
    %c0_11 = arith.constant 0 : index
    %c0_12 = arith.constant 0 : index
    %10 = vector.load %arg7[%c0_11, %c0_12] : memref<3x32xf32, #tpu.memory_space<vmem>>, vector<3x32xf32>
    %cst_13 = arith.constant dense<0.000000e+00> : vector<32x32xf32>
    %11 = tpu.matmul %9, %10, %cst_13 {dimension_numbers = #tpu.dot_dimension_numbers<[1], [0], [0], [1], [0, 0, 1, 1], [], []>} : vector<32x3xf32>, vector<3x32xf32>, vector<32x32xf32> -> vector<32x32xf32>
    %12 = arith.addf %5, %8 : vector<32x32xf32>
    %c0_14 = arith.constant 0 : index
    %c0_15 = arith.constant 0 : index
    %13 = vector.load %arg8[%c0_14, %c0_15] : memref<1x32xf32, #tpu.memory_space<vmem>>, vector<1x32xf32>
    %14 = vector.broadcast %13 : vector<1x32xf32> to vector<32x32xf32>
    %15 = arith.addf %12, %14 : vector<32x32xf32>
    %16 = vector.shape_cast %15 : vector<32x32xf32> to vector<32x1x32xf32>
    %17 = vector.shape_cast %11 : vector<32x32xf32> to vector<1x32x32xf32>
    %18 = vector.broadcast %16 : vector<32x1x32xf32> to vector<32x32x32xf32>
    %19 = vector.broadcast %17 : vector<1x32x32xf32> to vector<32x32x32xf32>
    %20 = arith.subf %18, %19 : vector<32x32x32xf32>
    %cst_16 = arith.constant 0.000000e+00 : f32
    %21 = vector.broadcast %cst_16 : f32 to vector<32x32x32xf32>
    %22 = arith.maximumf %20, %21 : vector<32x32x32xf32>
    %23 = arith.truncf %22 : vector<32x32x32xf32> to vector<32x32x32xbf16>
    %24 = vector.shape_cast %23 : vector<32x32x32xbf16> to vector<1024x32xbf16>
    %c0_17 = arith.constant 0 : index
    %c0_18 = arith.constant 0 : index
    %25 = vector.load %arg9[%c0_17, %c0_18] : memref<32x128xbf16, #tpu.memory_space<vmem>>, vector<32x128xbf16>
    %cst_19 = arith.constant dense<0.000000e+00> : vector<1024x128xf32>
    %26 = tpu.matmul %24, %25, %cst_19 {dimension_numbers = #tpu.dot_dimension_numbers<[1], [0], [0], [1], [0, 0, 1, 1], [], []>} : vector<1024x32xbf16>, vector<32x128xbf16>, vector<1024x128xf32> -> vector<1024x128xf32>
    %c0_20 = arith.constant 0 : index
    %c0_21 = arith.constant 0 : index
    %27 = vector.load %arg10[%c0_20, %c0_21] : memref<1x128xf32, #tpu.memory_space<vmem>>, vector<1x128xf32>
    %28 = vector.broadcast %27 : vector<1x128xf32> to vector<1024x128xf32>
    %29 = arith.addf %26, %28 : vector<1024x128xf32>
    %cst_22 = arith.constant 0.000000e+00 : f32
    %30 = vector.broadcast %cst_22 : f32 to vector<1024x128xf32>
    %31 = arith.maximumf %29, %30 : vector<1024x128xf32>
    %32 = vector.shape_cast %31 : vector<1024x128xf32> to vector<32x32x128xf32>
    %c0_23 = arith.constant 0 : index
    %c0_24 = arith.constant 0 : index
    %c0_25 = arith.constant 0 : index
    %33 = vector.load %arg5[%c0_23, %c0_24, %c0_25] : memref<1x32x32xf32, #tpu.memory_space<vmem>>, vector<1x32x32xf32>
    %34 = vector.shape_cast %33 : vector<1x32x32xf32> to vector<32x32xf32>
    %35 = vector.shape_cast %34 : vector<32x32xf32> to vector<32x32x1xf32>
    %36 = vector.broadcast %35 : vector<32x32x1xf32> to vector<32x32x128xf32>
    %37 = arith.mulf %32, %36 : vector<32x32x128xf32>
    %cst_26 = arith.constant dense<0xFF800000> : vector<32x128xf32>
    %38 = vector.multi_reduction <maximumf>, %37, %cst_26 [0] : vector<32x32x128xf32> to vector<32x128xf32>
    %c0_27 = arith.constant 0 : index
    %c0_28 = arith.constant 0 : index
    %39 = vector.load %arg11[%c0_27, %c0_28] : memref<32x128xf32, #tpu.memory_space<vmem>>, vector<32x128xf32>
    %40 = arith.maximumf %39, %38 : vector<32x128xf32>
    %c0_29 = arith.constant 0 : index
    %c0_30 = arith.constant 0 : index
    %41 = vector.load %arg11[%c0_29, %c0_30] : memref<32x128xf32, #tpu.memory_space<vmem>>, vector<32x128xf32>
    tpu.vector_store %arg11[%c0_29, %c0_30], %40 {strides = array<i32>} : memref<32x128xf32, #tpu.memory_space<vmem>>, vector<32x128xf32>,
    return
  }
  func.func @transform_0(%arg0: i32, %arg1: i32) -> (i32, i32) {
    %c0_i32 = arith.constant 0 : i32
    %c0_i32_0 = arith.constant 0 : i32
    return %arg1, %c0_i32 : i32, i32
  }
  func.func @transform_1(%arg0: i32, %arg1: i32) -> (i32, i32) {
    %c0_i32 = arith.constant 0 : i32
    %c0_i32_0 = arith.constant 0 : i32
    return %arg1, %c0_i32 : i32, i32
  }
  func.func @transform_2(%arg0: i32, %arg1: i32) -> (i32, i32) {
    %c0_i32 = arith.constant 0 : i32
    %c0_i32_0 = arith.constant 0 : i32
    return %arg0, %c0_i32 : i32, i32
  }
  func.func @transform_3(%arg0: i32, %arg1: i32) -> (i32, i32, i32) {
    %c0_i32 = arith.constant 0 : i32
    %c0_i32_0 = arith.constant 0 : i32
    return %arg0, %arg1, %c0_i32 : i32, i32, i32
  }
  func.func @transform_4(%arg0: i32, %arg1: i32) -> (i32, i32) {
    %c0_i32 = arith.constant 0 : i32
    %c0_i32_0 = arith.constant 0 : i32
    %c0_i32_1 = arith.constant 0 : i32
    return %c0_i32, %c0_i32_0 : i32, i32
  }
  func.func @transform_5(%arg0: i32, %arg1: i32) -> (i32, i32) {
    %c0_i32 = arith.constant 0 : i32
    %c0_i32_0 = arith.constant 0 : i32
    %c0_i32_1 = arith.constant 0 : i32
    return %c0_i32, %c0_i32_0 : i32, i32
  }
  func.func @transform_6(%arg0: i32, %arg1: i32) -> (i32, i32) {
    %c0_i32 = arith.constant 0 : i32
    %c0_i32_0 = arith.constant 0 : i32
    %c0_i32_1 = arith.constant 0 : i32
    return %c0_i32, %c0_i32_0 : i32, i32
  }
  func.func @transform_7(%arg0: i32, %arg1: i32) -> (i32, i32) {
    %c0_i32 = arith.constant 0 : i32
    %c0_i32_0 = arith.constant 0 : i32
    %c0_i32_1 = arith.constant 0 : i32
    return %c0_i32, %c0_i32_0 : i32, i32
  }
  func.func @transform_8(%arg0: i32, %arg1: i32) -> (i32, i32) {
    %c0_i32 = arith.constant 0 : i32
    %c0_i32_0 = arith.constant 0 : i32
    %c0_i32_1 = arith.constant 0 : i32
    return %c0_i32, %c0_i32_0 : i32, i32
  }
  func.func @transform_9(%arg0: i32, %arg1: i32) -> (i32, i32) {
    %c0_i32 = arith.constant 0 : i32
    %c0_i32_0 = arith.constant 0 : i32
    return %arg0, %c0_i32 : i32, i32
  }
}

</mosaic_0001>

<llo_original>
// kernel: tpu_custom_call.1
$region0: #{tpu_custom_call.1}
  #allocation0 [shape = 'u32[]', space=smem, size = 0x4, offset = 0x4, fixed_abs, tag = 'smem constant byte address 0x4 - core index']
  #allocation1 [shape = 'u32[144,128]{1,0:T(1,128)}', space=vmem, size = 0x12000, scoped, tag = 'internal scratch']
  %s0 = inlined_call_operand.vmem [shape: f32[64,4], index: 0, kind: input, shape index: {}]
  %s1 = inlined_call_operand.vmem [shape: f32[64,3], index: 1, kind: input, shape index: {}]
  %s2 = inlined_call_operand.vmem [shape: f32[64,3], index: 2, kind: input, shape index: {}]
  %s3 = inlined_call_operand.vmem [shape: f32[2,64,32], index: 3, kind: input, shape index: {}]
  %s4 = inlined_call_operand.vmem [shape: f32[4,32], index: 4, kind: input, shape index: {}]
  %s5 = inlined_call_operand.vmem [shape: f32[3,32], index: 5, kind: input, shape index: {}]
  %s6 = inlined_call_operand.vmem [shape: f32[1,32], index: 6, kind: input, shape index: {}]
  %s7 = inlined_call_operand.vmem [shape: bf16[32,128], index: 7, kind: input, shape index: {}]
  %s8 = inlined_call_operand.vmem [shape: f32[1,128], index: 8, kind: input, shape index: {}]
  %s9 = inlined_call_operand.hbm [shape: f32[64,128], index: 9, kind: output, shape index: {}]
  %s10 = sld [smem:[#allocation0]]
  $region73: #{tpu_custom_call.1} parent=0
    _
  %s12 = ssub.s32 1, %s10
  %s13 = scalar_select 0, %s12, %s10
  $region1: #{tpu_custom_call.1} parent=0
    #allocation2 [shape = 'u8[32768]{0}', space=vmem, size = 0x8000, scoped, tag = 'output window, operand 0']
    #allocation3 [shape = 's32[2]{0}', space=sflag, size = 0x8, scoped, tag = 'scoped memory for tpu_custom_call.1']
    %14 = vsyncpa [#allocation3], 0
    %s15 = scalar_lea.sflag [#allocation3], 1
    %16 = vsyncpa %s15, 0
    loop: start=0, step=1, limit=6
    $region2: #{tpu_custom_call.1} parent=1 // loop_pre_header
      _
    $region3: #{tpu_custom_call.1} parent=1 // loop_header
      %s18 = sphi 0, %s22
      %p19 = scmp.ge.s32.totalorder %s18, 6
      %s25 = sphi 0, %s37
      %s26 = sphi 0, %s33
      %s27 = sphi 0, %s25
      %s28 = sphi 0, %s26
      %s29 = sphi 0, %s27
      %s30 = sphi 0, %s28
      %s40 = sphi 0, %s42
      %s43 = sphi 0, %s40
      %s44 = sphi 0, %s43
      %s60 = sphi 0, %s44
      %s66 = sphi 0, %s68
      %s69 = sphi 0, %s66
      %s70 = sphi 0, %s69
      %s86 = sphi 0, %s70
      %s92 = sphi 0, %s94
      %s95 = sphi 0, %s92
      %s96 = sphi 0, %s95
      %s112 = sphi 0, %s96
      %s120 = sphi 0, %s122
      %s123 = sphi 0, %s120
      %s124 = sphi 0, %s123
      %s140 = sphi 0, %s124
      %s144 = sphi 0, %s144
      %s146 = sphi 0, %s144
      %s147 = sphi 0, %s146
      %s161 = sphi 0, %s147
      %s165 = sphi 0, %s165
      %s167 = sphi 0, %s165
      %s168 = sphi 0, %s167
      %s182 = sphi 0, %s168
      %s186 = sphi 0, %s186
      %s188 = sphi 0, %s186
      %s189 = sphi 0, %s188
      %s203 = sphi 0, %s189
      %s207 = sphi 0, %s207
      %s209 = sphi 0, %s207
      %s210 = sphi 0, %s209
      %s224 = sphi 0, %s210
      %s228 = sphi 0, %s228
      %s230 = sphi 0, %s228
      %s231 = sphi 0, %s230
      %s245 = sphi 0, %s231
      %s251 = sphi 0, %s253
      %s254 = sphi 0, %s251
      %s255 = sphi 0, %s254
      %s271 = sphi 0, %s255
    $region4: #{tpu_custom_call.1} parent=1 // loop_header_branch
      %21 = sbr.rel (%p19) target = $region8
    $region5: #{tpu_custom_call.1} parent=1 // loop_body
      %s23 = ssub.s32 %s18, 1
      %s24 = ssub.s32 %s18, 2
      %s31 = sadd.s32 1, %s26
      %p32 = scmp.ge.s32.totalorder %s31, 2
      %s33 = scalar_select %p32, 0, %s31
      %s34 = sadd.s32 1, %s25
      %s35 = scalar_select %p32, %s34, %s25
      %p36 = scmp.ge.s32.totalorder %s35, 2
      %s37 = scalar_select %p36, 0, %s35
      %s38 = ssub.s32 %s26, %s33
      %p39 = scmp.eq.s32.totalorder %s38, 0
      %s41 = sadd.s32 %s40, 1
      %s42 = scalar_select %p39, %s40, %s41
      %p45 = pneg %p39
      %p46 = scmp.eq.s32.totalorder %s18, 3
      %p47 = por %p45, %p46
      %p48 = scmp.ne.s32.totalorder %s40, %s43
      %p49 = scmp.eq.s32.totalorder %s18, 0
      %p50 = por %p48, %p49
      %p51 = scmp.ne.s32.totalorder %s40, %s43
      %p52 = scmp.eq.s32.totalorder %s23, 3
      %p53 = por %p51, %p52
      %p54 = scmp.ne.s32.totalorder %s43, %s44
      %p55 = scmp.eq.s32.totalorder %s23, 0
      %p56 = por %p54, %p55
      %p57 = scmp.ne.s32.totalorder %s43, %s44
      %p58 = scmp.eq.s32.totalorder %s24, 3
      %p59 = por %p57, %p58
      %p61 = scmp.ne.s32.totalorder %s44, %s60
      %p62 = scmp.eq.s32.totalorder %s24, 0
      %p63 = por %p61, %p62
      %s64 = ssub.s32 %s26, %s33
      %p65 = scmp.eq.s32.totalorder %s64, 0
      %s67 = sadd.s32 %s66, 1
      %s68 = scalar_select %p65, %s66, %s67
      %p71 = pneg %p65
      %p72 = scmp.eq.s32.totalorder %s18, 3
      %p73 = por %p71, %p72
      %p74 = scmp.ne.s32.totalorder %s66, %s69
      %p75 = scmp.eq.s32.totalorder %s18, 0
      %p76 = por %p74, %p75
      %p77 = scmp.ne.s32.totalorder %s66, %s69
      %p78 = scmp.eq.s32.totalorder %s23, 3
      %p79 = por %p77, %p78
      %p80 = scmp.ne.s32.totalorder %s69, %s70
      %p81 = scmp.eq.s32.totalorder %s23, 0
      %p82 = por %p80, %p81
      %p83 = scmp.ne.s32.totalorder %s69, %s70
      %p84 = scmp.eq.s32.totalorder %s24, 3
      %p85 = por %p83, %p84
      %p87 = scmp.ne.s32.totalorder %s70, %s86
      %p88 = scmp.eq.s32.totalorder %s24, 0
      %p89 = por %p87, %p88
      %s90 = ssub.s32 %s25, %s37
      %p91 = scmp.eq.s32.totalorder %s90, 0
      %s93 = sadd.s32 %s92, 1
      %s94 = scalar_select %p91, %s92, %s93
      %p97 = pneg %p91
      %p98 = scmp.eq.s32.totalorder %s18, 3
      %p99 = por %p97, %p98
      %p100 = scmp.ne.s32.totalorder %s92, %s95
      %p101 = scmp.eq.s32.totalorder %s18, 0
      %p102 = por %p100, %p101
      %p103 = scmp.ne.s32.totalorder %s92, %s95
      %p104 = scmp.eq.s32.totalorder %s23, 3
      %p105 = por %p103, %p104
      %p106 = scmp.ne.s32.totalorder %s95, %s96
      %p107 = scmp.eq.s32.totalorder %s23, 0
      %p108 = por %p106, %p107
      %p109 = scmp.ne.s32.totalorder %s95, %s96
      %p110 = scmp.eq.s32.totalorder %s24, 3
      %p111 = por %p109, %p110
      %p113 = scmp.ne.s32.totalorder %s96, %s112
      %p114 = scmp.eq.s32.totalorder %s24, 0
      %p115 = por %p113, %p114
      %s116 = ssub.s32 %s25, %s37
      %s117 = ssub.s32 %s26, %s33
      %s118 = sor.u32 %s116, %s117
      %p119 = scmp.eq.s32.totalorder %s118, 0
      %s121 = sadd.s32 %s120, 1
      %s122 = scalar_select %p119, %s120, %s121
      %p125 = pneg %p119
      %p126 = scmp.eq.s32.totalorder %s18, 3
      %p127 = por %p125, %p126
      %p128 = scmp.ne.s32.totalorder %s120, %s123
      %p129 = scmp.eq.s32.totalorder %s18, 0
      %p130 = por %p128, %p129
      %p131 = scmp.ne.s32.totalorder %s120, %s123
      %p132 = scmp.eq.s32.totalorder %s23, 3
      %p133 = por %p131, %p132
      %p134 = scmp.ne.s32.totalorder %s123, %s124
      %p135 = scmp.eq.s32.totalorder %s23, 0
      %p136 = por %p134, %p135
      %p137 = scmp.ne.s32.totalorder %s123, %s124
      %p138 = scmp.eq.s32.totalorder %s24, 3
      %p139 = por %p137, %p138
      %p141 = scmp.ne.s32.totalorder %s124, %s140
      %p142 = scmp.eq.s32.totalorder %s24, 0
      %p143 = por %p141, %p142
      %s145 = sadd.s32 %s144, 1
      %p148 = scmp.eq.s32.totalorder %s18, 3
      %p149 = scmp.ne.s32.totalorder %s144, %s146
      %p150 = scmp.eq.s32.totalorder %s18, 0
      %p151 = por %p149, %p150
      %p152 = scmp.ne.s32.totalorder %s144, %s146
      %p153 = scmp.eq.s32.totalorder %s23, 3
      %p154 = por %p152, %p153
      %p155 = scmp.ne.s32.totalorder %s146, %s147
      %p156 = scmp.eq.s32.totalorder %s23, 0
      %p157 = por %p155, %p156
      %p158 = scmp.ne.s32.totalorder %s146, %s147
      %p159 = scmp.eq.s32.totalorder %s24, 3
      %p160 = por %p158, %p159
      %p162 = scmp.ne.s32.totalorder %s147, %s161
      %p163 = scmp.eq.s32.totalorder %s24, 0
      %p164 = por %p162, %p163
      %s166 = sadd.s32 %s165, 1
      %p169 = scmp.eq.s32.totalorder %s18, 3
      %p170 = scmp.ne.s32.totalorder %s165, %s167
      %p171 = scmp.eq.s32.totalorder %s18, 0
      %p172 = por %p170, %p171
      %p173 = scmp.ne.s32.totalorder %s165, %s167
      %p174 = scmp.eq.s32.totalorder %s23, 3
      %p175 = por %p173, %p174
      %p176 = scmp.ne.s32.totalorder %s167, %s168
      %p177 = scmp.eq.s32.totalorder %s23, 0
      %p178 = por %p176, %p177
      %p179 = scmp.ne.s32.totalorder %s167, %s168
      %p180 = scmp.eq.s32.totalorder %s24, 3
      %p181 = por %p179, %p180
      %p183 = scmp.ne.s32.totalorder %s168, %s182
      %p184 = scmp.eq.s32.totalorder %s24, 0
      %p185 = por %p183, %p184
      %s187 = sadd.s32 %s186, 1
      %p190 = scmp.eq.s32.totalorder %s18, 3
      %p191 = scmp.ne.s32.totalorder %s186, %s188
      %p192 = scmp.eq.s32.totalorder %s18, 0
      %p193 = por %p191, %p192
      %p194 = scmp.ne.s32.totalorder %s186, %s188
      %p195 = scmp.eq.s32.totalorder %s23, 3
      %p196 = por %p194, %p195
      %p197 = scmp.ne.s32.totalorder %s188, %s189
      %p198 = scmp.eq.s32.totalorder %s23, 0
      %p199 = por %p197, %p198
      %p200 = scmp.ne.s32.totalorder %s188, %s189
      %p201 = scmp.eq.s32.totalorder %s24, 3
      %p202 = por %p200, %p201
      %p204 = scmp.ne.s32.totalorder %s189, %s203
      %p205 = scmp.eq.s32.totalorder %s24, 0
      %p206 = por %p204, %p205
      %s208 = sadd.s32 %s207, 1
      %p211 = scmp.eq.s32.totalorder %s18, 3
      %p212 = scmp.ne.s32.totalorder %s207, %s209
      %p213 = scmp.eq.s32.totalorder %s18, 0
      %p214 = por %p212, %p213
      %p215 = scmp.ne.s32.totalorder %s207, %s209
      %p216 = scmp.eq.s32.totalorder %s23, 3
      %p217 = por %p215, %p216
      %p218 = scmp.ne.s32.totalorder %s209, %s210
      %p219 = scmp.eq.s32.totalorder %s23, 0
      %p220 = por %p218, %p219
      %p221 = scmp.ne.s32.totalorder %s209, %s210
      %p222 = scmp.eq.s32.totalorder %s24, 3
      %p223 = por %p221, %p222
      %p225 = scmp.ne.s32.totalorder %s210, %s224
      %p226 = scmp.eq.s32.totalorder %s24, 0
      %p227 = por %p225, %p226
      %s229 = sadd.s32 %s228, 1
      %p232 = scmp.eq.s32.totalorder %s18, 3
      %p233 = scmp.ne.s32.totalorder %s228, %s230
      %p234 = scmp.eq.s32.totalorder %s18, 0
      %p235 = por %p233, %p234
      %p236 = scmp.ne.s32.totalorder %s228, %s230
      %p237 = scmp.eq.s32.totalorder %s23, 3
      %p238 = por %p236, %p237
      %p239 = scmp.ne.s32.totalorder %s230, %s231
      %p240 = scmp.eq.s32.totalorder %s23, 0
      %p241 = por %p239, %p240
      %p242 = scmp.ne.s32.totalorder %s230, %s231
      %p243 = scmp.eq.s32.totalorder %s24, 3
      %p244 = por %p242, %p243
      %p246 = scmp.ne.s32.totalorder %s231, %s245
      %p247 = scmp.eq.s32.totalorder %s24, 0
      %p248 = por %p246, %p247
      %s249 = ssub.s32 %s25, %s37
      %p250 = scmp.eq.s32.totalorder %s249, 0
      %s252 = sadd.s32 %s251, 1
      %s253 = scalar_select %p250, %s251, %s252
      %p256 = pneg %p250
      %p257 = scmp.eq.s32.totalorder %s18, 3
      %p258 = por %p256, %p257
      %p259 = scmp.ne.s32.totalorder %s251, %s254
      %p260 = scmp.eq.s32.totalorder %s18, 0
      %p261 = por %p259, %p260
      %p262 = scmp.ne.s32.totalorder %s251, %s254
      %p263 = scmp.eq.s32.totalorder %s23, 3
      %p264 = por %p262, %p263
      %p265 = scmp.ne.s32.totalorder %s254, %s255
      %p266 = scmp.eq.s32.totalorder %s23, 0
      %p267 = por %p265, %p266
      %p268 = scmp.ne.s32.totalorder %s254, %s255
      %p269 = scmp.eq.s32.totalorder %s24, 3
      %p270 = por %p268, %p269
      %p272 = scmp.ne.s32.totalorder %s255, %s271
      %p273 = scmp.eq.s32.totalorder %s24, 0
      %p274 = por %p272, %p273
      %p275 = scmp.le.s32.totalorder 1, %s18
      %p276 = scmp.lt.s32.totalorder %s18, 5
      %p277 = pnand %p275, %p276
      %p278 = pneg %p277
      // Predicated region
      $region9: #{tpu_custom_call.1} parent=5 // pred_check
        _
      $region10: #{tpu_custom_call.1} parent=5 // pred_check_branch
        %280 = sbr.rel (%p277) target = $region12
      $region11: #{tpu_custom_call.1} parent=5 // pred_region
        %s281 = ssub.s32 %s18, 1
        // Predicated region
        $region13: #{tpu_custom_call.1} parent=11 // pred_check
          %p282 = pneg %p157
        $region14: #{tpu_custom_call.1} parent=11 // pred_check_branch
          %284 = sbr.rel (%p282) target = $region16
        $region15: #{tpu_custom_call.1} parent=11 // pred_region
          _
        $region16: #{tpu_custom_call.1} parent=11 // pred_fallthru
          _
        // Predicated region
        $region17: #{tpu_custom_call.1} parent=11 // pred_check
          %p285 = pneg %p178
        $region18: #{tpu_custom_call.1} parent=11 // pred_check_branch
          %287 = sbr.rel (%p285) target = $region20
        $region19: #{tpu_custom_call.1} parent=11 // pred_region
          _
        $region20: #{tpu_custom_call.1} parent=11 // pred_fallthru
          _
        // Predicated region
        $region21: #{tpu_custom_call.1} parent=11 // pred_check
          %p288 = pneg %p199
        $region22: #{tpu_custom_call.1} parent=11 // pred_check_branch
          %290 = sbr.rel (%p288) target = $region24
        $region23: #{tpu_custom_call.1} parent=11 // pred_region
          _
        $region24: #{tpu_custom_call.1} parent=11 // pred_fallthru
          _
        // Predicated region
        $region25: #{tpu_custom_call.1} parent=11 // pred_check
          %p291 = pneg %p220
        $region26: #{tpu_custom_call.1} parent=11 // pred_check_branch
          %293 = sbr.rel (%p291) target = $region28
        $region27: #{tpu_custom_call.1} parent=11 // pred_region
          _
        $region28: #{tpu_custom_call.1} parent=11 // pred_fallthru
          _
        // Predicated region
        $region29: #{tpu_custom_call.1} parent=11 // pred_check
          %p294 = pneg %p241
        $region30: #{tpu_custom_call.1} parent=11 // pred_check_branch
          %296 = sbr.rel (%p294) target = $region32
        $region31: #{tpu_custom_call.1} parent=11 // pred_region
          _
        $region32: #{tpu_custom_call.1} parent=11 // pred_fallthru
          _
      $region12: #{tpu_custom_call.1} parent=5 // pred_fallthru
        _
      %p297 = scmp.lt.s32.totalorder %s18, 4
      // Predicated region
      $region33: #{tpu_custom_call.1} parent=5 // pred_check
        %p298 = pneg %p297
      $region34: #{tpu_custom_call.1} parent=5 // pred_check_branch
        %300 = sbr.rel (%p298) target = $region36
      $region35: #{tpu_custom_call.1} parent=5 // pred_region
        // Predicated region
        $region37: #{tpu_custom_call.1} parent=35 // pred_check
          %p301 = pneg %p50
        $region38: #{tpu_custom_call.1} parent=35 // pred_check_branch
          %303 = sbr.rel (%p301) target = $region40
        $region39: #{tpu_custom_call.1} parent=35 // pred_region
          %s304 = smul.u32 4, %s26
          %p305 = scmp.lt.s32.totalorder %s304, 7
          %s306 = scalar_select %p305, %s304, 7
          %s307 = smul.addr %s306, 8
          %s308 = scalar_lea.vmem %s0, %s307
          %s309 = smul.u32 4, %s26
        $region40: #{tpu_custom_call.1} parent=35 // pred_fallthru
          _
        // Predicated region
        $region41: #{tpu_custom_call.1} parent=35 // pred_check
          %p310 = pneg %p76
        $region42: #{tpu_custom_call.1} parent=35 // pred_check_branch
          %312 = sbr.rel (%p310) target = $region44
        $region43: #{tpu_custom_call.1} parent=35 // pred_region
          %s313 = smul.u32 4, %s26
          %p314 = scmp.lt.s32.totalorder %s313, 7
          %s315 = scalar_select %p314, %s313, 7
          %s316 = smul.addr %s315, 8
          %s317 = scalar_lea.vmem %s1, %s316
          %s318 = smul.u32 4, %s26
        $region44: #{tpu_custom_call.1} parent=35 // pred_fallthru
          _
        // Predicated region
        $region45: #{tpu_custom_call.1} parent=35 // pred_check
          %p319 = pneg %p102
        $region46: #{tpu_custom_call.1} parent=35 // pred_check_branch
          %321 = sbr.rel (%p319) target = $region48
        $region47: #{tpu_custom_call.1} parent=35 // pred_region
          %s322 = smul.u32 4, %s25
          %p323 = scmp.lt.s32.totalorder %s322, 7
          %s324 = scalar_select %p323, %s322, 7
          %s325 = smul.addr %s324, 8
          %s326 = scalar_lea.vmem %s2, %s325
          %s327 = smul.u32 4, %s25
        $region48: #{tpu_custom_call.1} parent=35 // pred_fallthru
          _
        // Predicated region
        $region49: #{tpu_custom_call.1} parent=35 // pred_check
          %p328 = pneg %p130
        $region50: #{tpu_custom_call.1} parent=35 // pred_check_branch
          %330 = sbr.rel (%p328) target = $region52
        $region51: #{tpu_custom_call.1} parent=35 // pred_region
          %s331 = smul.u32 4, %s26
          %p332 = scmp.lt.s32.totalorder %s25, 1
          %s333 = scalar_select %p332, %s25, 1
          %p334 = scmp.lt.s32.totalorder %s331, 7
          %s335 = scalar_select %p334, %s331, 7
          %s336 = smul.addr %s333, 8
          %s337 = sadd.s32 %s335, %s336
          %s338 = smul.addr %s337, 8
          %s339 = scalar_lea.vmem %s3, %s338
          %s340 = smul.u32 4, %s26
        $region52: #{tpu_custom_call.1} parent=35 // pred_fallthru
          _
      $region36: #{tpu_custom_call.1} parent=5 // pred_fallthru
        _
      %p341 = scmp.le.s32.totalorder 1, %s18
      %p342 = scmp.lt.s32.totalorder %s18, 5
      %p343 = pnand %p341, %p342
      %p344 = pneg %p343
      // Predicated region
      $region53: #{tpu_custom_call.1} parent=5 // pred_check
        _
      $region54: #{tpu_custom_call.1} parent=5 // pred_check_branch
        %346 = sbr.rel (%p343) target = $region56
      $region55: #{tpu_custom_call.1} parent=5 // pred_region
        %s347 = ssub.s32 %s18, 1
        %s348 = smul.u32 4, %s28
        %p349 = scmp.lt.s32.totalorder %s348, 7
        %s350 = scalar_select %p349, %s348, 7
        %s351 = smul.addr %s350, 8
        %s352 = scalar_lea.vmem %s0, %s351
        %p353 = pneg %p56
        %p354 = pneg %p53
        %s355 = smul.u32 4, %s28
        %p356 = scmp.lt.s32.totalorder %s355, 7
        %s357 = scalar_select %p356, %s355, 7
        %s358 = smul.addr %s357, 8
        %s359 = scalar_lea.vmem %s1, %s358
        %p360 = pneg %p82
        %p361 = pneg %p79
        %s362 = smul.u32 4, %s27
        %p363 = scmp.lt.s32.totalorder %s362, 7
        %s364 = scalar_select %p363, %s362, 7
        %s365 = smul.addr %s364, 8
        %s366 = scalar_lea.vmem %s2, %s365
        %p367 = pneg %p108
        %p368 = pneg %p105
        %s369 = smul.u32 4, %s28
        %p370 = scmp.lt.s32.totalorder %s27, 1
        %s371 = scalar_select %p370, %s27, 1
        %p372 = scmp.lt.s32.totalorder %s369, 7
        %s373 = scalar_select %p372, %s369, 7
        %s374 = smul.addr %s371, 8
        %s375 = sadd.s32 %s373, %s374
        %s376 = smul.addr %s375, 8
        %s377 = scalar_lea.vmem %s3, %s376
        %p378 = pneg %p136
        %p379 = pneg %p133
        %p380 = pneg %p157
        %p381 = pneg %p154
        %p382 = pneg %p178
        %p383 = pneg %p175
        %p384 = pneg %p199
        %p385 = pneg %p196
        %p386 = pneg %p220
        %p387 = pneg %p217
        %p388 = pneg %p241
        %p389 = pneg %p238
        %p390 = pneg %p267
        %p391 = pneg %p264
        %s392 = sand.u32 %s254, 1
        %s393 = scalar_lea.sflag [#allocation3], %s392
        %s394 = sand.u32 %s254, 1
        %s395 = smul.addr %s394, 32
        %s396 = scalar_lea.vmem [#allocation2], %s395
        %s397 = smul.u32 4, %s28
        %p398 = scmp.lt.s32.totalorder %s397, 7
        %s399 = scalar_select %p398, %s397, 7
        %s400 = smul.addr %s399, 8
        %s401 = scalar_lea.vmem %s0, %s400
        %s402 = smul.u32 4, %s28
        %s403 = smul.u32 4, %s28
        %p404 = scmp.lt.s32.totalorder %s403, 7
        %s405 = scalar_select %p404, %s403, 7
        %s406 = smul.addr %s405, 8
        %s407 = scalar_lea.vmem %s1, %s406
        %s408 = smul.u32 4, %s28
        %s409 = smul.u32 4, %s27
        %p410 = scmp.lt.s32.totalorder %s409, 7
        %s411 = scalar_select %p410, %s409, 7
        %s412 = smul.addr %s411, 8
        %s413 = scalar_lea.vmem %s2, %s412
        %s414 = smul.u32 4, %s27
        %s415 = smul.u32 4, %s28
        %p416 = scmp.lt.s32.totalorder %s27, 1
        %s417 = scalar_select %p416, %s27, 1
        %p418 = scmp.lt.s32.totalorder %s415, 7
        %s419 = scalar_select %p418, %s415, 7
        %s420 = smul.addr %s417, 8
        %s421 = sadd.s32 %s419, %s420
        %s422 = smul.addr %s421, 8
        %s423 = scalar_lea.vmem %s3, %s422
        %s424 = smul.u32 4, %s28
        %s425 = smul.u32 4, %s27
        %p427 = scmp.eq.s32.totalorder %s28, 0
        // Predicated region
        $region57: #{tpu_custom_call.1} parent=55 // pred_check
          %p428 = pneg %p427
        $region58: #{tpu_custom_call.1} parent=55 // pred_check_branch
          %430 = sbr.rel (%p428) target = $region60
        $region59: #{tpu_custom_call.1} parent=55 // pred_region
          %431 = vst [vmem:[%s396] sm:$0xff] 0.0
          %432 = vst [vmem:[%s396 + $0x8] sm:$0xff] 0.0
          %433 = vst [vmem:[%s396 + $0x10] sm:$0xff] 0.0
          %434 = vst [vmem:[%s396 + $0x18] sm:$0xff] 0.0
        $region60: #{tpu_custom_call.1} parent=55 // pred_fallthru
          _
        %v435 = vld [vmem:[%s401] sm:$0xff]
        %v436 = vld [vmem:[%s401 + $0x8] sm:$0xff]
        %v437 = vld [vmem:[%s401 + $0x10] sm:$0xff]
        %v438 = vld [vmem:[%s401 + $0x18] sm:$0xff]
        %v439 = vld [vmem:[%s4] sm:$0xf]
        %v440 = vld [vmem:[%s407] sm:$0xff]
        %v441 = vld [vmem:[%s407 + $0x8] sm:$0xff]
        %v442 = vld [vmem:[%s407 + $0x10] sm:$0xff]
        %v443 = vld [vmem:[%s407 + $0x18] sm:$0xff]
        %v444 = vld [vmem:[%s5] sm:$0x7]
        %vm445 = vcmask 23552
        %v447 = vsel %vm445, %v440, 0
        %v450 = vsel %vm445, %v441, 0
        %v453 = vsel %vm445, %v442, 0
        %v456 = vsel %vm445, %v443, 0
        %vm458 = vcmask 1042432
        %v460 = vsel %vm458, %v444, 0
        %462 = vmatprep.subr.mxu0 0.0
        %463 = vmatpush1.msra.mxu0 %v460
        %464 = vmatprep.subr.mxu0 0.0
        %465 = vmatpush1.msra.mxu0 0.0
        %466 = vmatprep.subr.mxu0 0.0
        %467 = vmatpush1.msra.mxu0 0.0
        %468 = vmatprep.subr.mxu0 0.0
        %469 = vmatpush1.msra.mxu0 0.0
        %470 = vmatprep.subr.mxu0 0.0
        %471 = vmatpush1.msra.mxu0 0.0
        %472 = vmatprep.subr.mxu0 0.0
        %473 = vmatpush1.msra.mxu0 0.0
        %474 = vmatprep.subr.mxu0 0.0
        %475 = vmatpush1.msra.mxu0 0.0
        %476 = vmatprep.subr.mxu0 0.0
        %477 = vmatpush1.msra.mxu0 0.0
        %478 = vmatprep.subr.mxu0 0.0
        %479 = vmatpush1.msra.mxu0 0.0
        %480 = vmatprep.subr.mxu0 0.0
        %481 = vmatpush1.msra.mxu0 0.0
        %482 = vmatprep.subr.mxu0 0.0
        %483 = vmatpush1.msra.mxu0 0.0
        %484 = vmatprep.subr.mxu0 0.0
        %485 = vmatpush1.msra.mxu0 0.0
        %486 = vmatprep.subr.mxu0 0.0
        %487 = vmatpush1.msra.mxu0 0.0
        %488 = vmatprep.subr.mxu0 0.0
        %489 = vmatpush1.msra.mxu0 0.0
        %490 = vmatprep.subr.mxu0 0.0
        %491 = vmatpush1.msra.mxu0 0.0
        %492 = vmatprep.subr.mxu0 0.0
        %493 = vmatpush1.msra.mxu0 0.0
        %494 = vmatprep.subr.mxu0 0.0
        %495 = vmatpush1.msra.mxu0 0.0
        %496 = vmatprep.subr.mxu0 0.0
        %497 = vmatpush1.msra.mxu0 0.0
        %498 = vmatprep.subr.mxu0 0.0
        %499 = vmatpush1.msra.mxu0 0.0
        %500 = vmatprep.subr.mxu0 0.0
        %501 = vmatpush1.msra.mxu0 0.0
        %502 = vmatprep.subr.mxu0 0.0
        %503 = vmatpush1.msra.mxu0 0.0
        %504 = vmatprep.subr.mxu0 0.0
        %505 = vmatpush1.msra.mxu0 0.0
        %506 = vmatprep.subr.mxu0 0.0
        %507 = vmatpush1.msra.mxu0 0.0
        %508 = vmatprep.subr.mxu0 0.0
        %509 = vmatpush1.msra.mxu0 0.0
        %510 = vmatprep.subr.mxu0 0.0
        %511 = vmatpush1.msra.mxu0 0.0
        %512 = vmatprep.subr.mxu0 0.0
        %513 = vmatpush1.msra.mxu0 0.0
        %514 = vmatprep.subr.mxu0 0.0
        %515 = vmatpush1.msra.mxu0 0.0
        %516 = vmatprep.subr.mxu0 0.0
        %517 = vmatpush1.msra.mxu0 0.0
        %518 = vmatprep.subr.mxu0 0.0
        %519 = vmatpush1.msra.mxu0 0.0
        %520 = vmatprep.subr.mxu0 0.0
        %521 = vmatpush1.msra.mxu0 0.0
        %522 = vmatprep.subr.mxu0 0.0
        %523 = vmatpush1.msra.mxu0 0.0
        %524 = vmatprep.subr.mxu0 0.0
        %525 = vmatpush1.msra.mxu0 0.0
        %526 = vmatprep.mubr.f32.mxu0 0.0
        %527 = vmatmul.mubr.f32.gmra.mrb[0].mxu0 %v447
        %v528 = vpop.f32.mrb[0].mxu0
        %v529 = vadd.f32 0.0, %v528
        %v530 = vpop.f32.mrb[0].mxu0
        %531 = vmatprep.mubr.f32.mxu0 0.0
        %532 = vmatmul.mubr.f32.gmra.mrb[0].mxu0 %v450
        %v533 = vpop.f32.mrb[0].mxu0
        %v534 = vadd.f32 0.0, %v533
        %v535 = vpop.f32.mrb[0].mxu0
        %536 = vmatprep.mubr.f32.mxu0 0.0
        %537 = vmatmul.mubr.f32.gmra.mrb[0].mxu0 %v453
        %v538 = vpop.f32.mrb[0].mxu0
        %v539 = vadd.f32 0.0, %v538
        %v540 = vpop.f32.mrb[0].mxu0
        %541 = vmatprep.mubr.f32.mxu0 0.0
        %542 = vmatmul.mubr.f32.gmra.mrb[0].mxu0 %v456
        %v543 = vpop.f32.mrb[0].mxu0
        %v544 = vadd.f32 0.0, %v543
        %v545 = vpop.f32.mrb[0].mxu0
        %546 = vdwg.mxu0
        %v547 = vld [vmem:[%s413] sm:$0xff]
        %v548 = vld [vmem:[%s413 + $0x8] sm:$0xff]
        %v549 = vld [vmem:[%s413 + $0x10] sm:$0xff]
        %v550 = vld [vmem:[%s413 + $0x18] sm:$0xff]
        %v552 = vsel %vm445, %v547, 0
        %v555 = vsel %vm445, %v548, 0
        %v558 = vsel %vm445, %v549, 0
        %v561 = vsel %vm445, %v550, 0
        %563 = vmatprep.subr.mxu0 0.0
        %564 = vmatpush1.msra.mxu0 %v460
        %565 = vmatprep.subr.mxu0 0.0
        %566 = vmatpush1.msra.mxu0 0.0
        %567 = vmatprep.subr.mxu0 0.0
        %568 = vmatpush1.msra.mxu0 0.0
        %569 = vmatprep.subr.mxu0 0.0
        %570 = vmatpush1.msra.mxu0 0.0
        %571 = vmatprep.subr.mxu0 0.0
        %572 = vmatpush1.msra.mxu0 0.0
        %573 = vmatprep.subr.mxu0 0.0
        %574 = vmatpush1.msra.mxu0 0.0
        %575 = vmatprep.subr.mxu0 0.0
        %576 = vmatpush1.msra.mxu0 0.0
        %577 = vmatprep.subr.mxu0 0.0
        %578 = vmatpush1.msra.mxu0 0.0
        %579 = vmatprep.subr.mxu0 0.0
        %580 = vmatpush1.msra.mxu0 0.0
        %581 = vmatprep.subr.mxu0 0.0
        %582 = vmatpush1.msra.mxu0 0.0
        %583 = vmatprep.subr.mxu0 0.0
        %584 = vmatpush1.msra.mxu0 0.0
        %585 = vmatprep.subr.mxu0 0.0
        %586 = vmatpush1.msra.mxu0 0.0
        %587 = vmatprep.subr.mxu0 0.0
        %588 = vmatpush1.msra.mxu0 0.0
        %589 = vmatprep.subr.mxu0 0.0
        %590 = vmatpush1.msra.mxu0 0.0
        %591 = vmatprep.subr.mxu0 0.0
        %592 = vmatpush1.msra.mxu0 0.0
        %593 = vmatprep.subr.mxu0 0.0
        %594 = vmatpush1.msra.mxu0 0.0
        %595 = vmatprep.subr.mxu0 0.0
        %596 = vmatpush1.msra.mxu0 0.0
        %597 = vmatprep.subr.mxu0 0.0
        %598 = vmatpush1.msra.mxu0 0.0
        %599 = vmatprep.subr.mxu0 0.0
        %600 = vmatpush1.msra.mxu0 0.0
        %601 = vmatprep.subr.mxu0 0.0
        %602 = vmatpush1.msra.mxu0 0.0
        %603 = vmatprep.subr.mxu0 0.0
        %604 = vmatpush1.msra.mxu0 0.0
        %605 = vmatprep.subr.mxu0 0.0
        %606 = vmatpush1.msra.mxu0 0.0
        %607 = vmatprep.subr.mxu0 0.0
        %608 = vmatpush1.msra.mxu0 0.0
        %609 = vmatprep.subr.mxu0 0.0
        %610 = vmatpush1.msra.mxu0 0.0
        %611 = vmatprep.subr.mxu0 0.0
        %612 = vmatpush1.msra.mxu0 0.0
        %613 = vmatprep.subr.mxu0 0.0
        %614 = vmatpush1.msra.mxu0 0.0
        %615 = vmatprep.subr.mxu0 0.0
        %616 = vmatpush1.msra.mxu0 0.0
        %617 = vmatprep.subr.mxu0 0.0
        %618 = vmatpush1.msra.mxu0 0.0
        %619 = vmatprep.subr.mxu0 0.0
        %620 = vmatpush1.msra.mxu0 0.0
        %621 = vmatprep.subr.mxu0 0.0
        %622 = vmatpush1.msra.mxu0 0.0
        %623 = vmatprep.subr.mxu0 0.0
        %624 = vmatpush1.msra.mxu0 0.0
        %625 = vmatprep.subr.mxu0 0.0
        %626 = vmatpush1.msra.mxu0 0.0
        %627 = vmatprep.mubr.f32.mxu0 0.0
        %628 = vmatmul.mubr.f32.gmra.mrb[0].mxu0 %v552
        %v629 = vpop.f32.mrb[0].mxu0
        %v630 = vadd.f32 0.0, %v629
        %v631 = vpop.f32.mrb[0].mxu0
        %632 = vmatprep.mubr.f32.mxu0 0.0
        %633 = vmatmul.mubr.f32.gmra.mrb[0].mxu0 %v555
        %v634 = vpop.f32.mrb[0].mxu0
        %v635 = vadd.f32 0.0, %v634
        %v636 = vpop.f32.mrb[0].mxu0
        %637 = vmatprep.mubr.f32.mxu0 0.0
        %638 = vmatmul.mubr.f32.gmra.mrb[0].mxu0 %v558
        %v639 = vpop.f32.mrb[0].mxu0
        %v640 = vadd.f32 0.0, %v639
        %v641 = vpop.f32.mrb[0].mxu0
        %642 = vmatprep.mubr.f32.mxu0 0.0
        %643 = vmatmul.mubr.f32.gmra.mrb[0].mxu0 %v561
        %v644 = vpop.f32.mrb[0].mxu0
        %v645 = vadd.f32 0.0, %v644
        %v646 = vpop.f32.mrb[0].mxu0
        %647 = vdwg.mxu0
        %vm648 = vcmask 31744
        %v650 = vsel %vm648, %v435, 0
        %v653 = vsel %vm648, %v436, 0
        %v656 = vsel %vm648, %v437, 0
        %v659 = vsel %vm648, %v438, 0
        %vm661 = vcmask 1043456
        %v663 = vsel %vm661, %v439, 0
        %665 = vmatprep.subr.mxu0 0.0
        %666 = vmatpush1.msra.mxu0 %v663
        %667 = vmatprep.subr.mxu0 0.0
        %668 = vmatpush1.msra.mxu0 0.0
        %669 = vmatprep.subr.mxu0 0.0
        %670 = vmatpush1.msra.mxu0 0.0
        %671 = vmatprep.subr.mxu0 0.0
        %672 = vmatpush1.msra.mxu0 0.0
        %673 = vmatprep.subr.mxu0 0.0
        %674 = vmatpush1.msra.mxu0 0.0
        %675 = vmatprep.subr.mxu0 0.0
        %676 = vmatpush1.msra.mxu0 0.0
        %677 = vmatprep.subr.mxu0 0.0
        %678 = vmatpush1.msra.mxu0 0.0
        %679 = vmatprep.subr.mxu0 0.0
        %680 = vmatpush1.msra.mxu0 0.0
        %681 = vmatprep.subr.mxu0 0.0
        %682 = vmatpush1.msra.mxu0 0.0
        %683 = vmatprep.subr.mxu0 0.0
        %684 = vmatpush1.msra.mxu0 0.0
        %685 = vmatprep.subr.mxu0 0.0
        %686 = vmatpush1.msra.mxu0 0.0
        %687 = vmatprep.subr.mxu0 0.0
        %688 = vmatpush1.msra.mxu0 0.0
        %689 = vmatprep.subr.mxu0 0.0
        %690 = vmatpush1.msra.mxu0 0.0
        %691 = vmatprep.subr.mxu0 0.0
        %692 = vmatpush1.msra.mxu0 0.0
        %693 = vmatprep.subr.mxu0 0.0
        %694 = vmatpush1.msra.mxu0 0.0
        %695 = vmatprep.subr.mxu0 0.0
        %696 = vmatpush1.msra.mxu0 0.0
        %697 = vmatprep.subr.mxu0 0.0
        %698 = vmatpush1.msra.mxu0 0.0
        %699 = vmatprep.subr.mxu0 0.0
        %700 = vmatpush1.msra.mxu0 0.0
        %701 = vmatprep.subr.mxu0 0.0
        %702 = vmatpush1.msra.mxu0 0.0
        %703 = vmatprep.subr.mxu0 0.0
        %704 = vmatpush1.msra.mxu0 0.0
        %705 = vmatprep.subr.mxu0 0.0
        %706 = vmatpush1.msra.mxu0 0.0
        %707 = vmatprep.subr.mxu0 0.0
        %708 = vmatpush1.msra.mxu0 0.0
        %709 = vmatprep.subr.mxu0 0.0
        %710 = vmatpush1.msra.mxu0 0.0
        %711 = vmatprep.subr.mxu0 0.0
        %712 = vmatpush1.msra.mxu0 0.0
        %713 = vmatprep.subr.mxu0 0.0
        %714 = vmatpush1.msra.mxu0 0.0
        %715 = vmatprep.subr.mxu0 0.0
        %716 = vmatpush1.msra.mxu0 0.0
        %717 = vmatprep.subr.mxu0 0.0
        %718 = vmatpush1.msra.mxu0 0.0
        %719 = vmatprep.subr.mxu0 0.0
        %720 = vmatpush1.msra.mxu0 0.0
        %721 = vmatprep.subr.mxu0 0.0
        %722 = vmatpush1.msra.mxu0 0.0
        %723 = vmatprep.subr.mxu0 0.0
        %724 = vmatpush1.msra.mxu0 0.0
        %725 = vmatprep.subr.mxu0 0.0
        %726 = vmatpush1.msra.mxu0 0.0
        %727 = vmatprep.subr.mxu0 0.0
        %728 = vmatpush1.msra.mxu0 0.0
        %729 = vmatprep.mubr.f32.mxu0 0.0
        %730 = vmatmul.mubr.f32.gmra.mrb[0].mxu0 %v650
        %v731 = vpop.f32.mrb[0].mxu0
        %v732 = vadd.f32 %v529, %v731
        %v733 = vpop.f32.mrb[0].mxu0
        %734 = vmatprep.mubr.f32.mxu0 0.0
        %735 = vmatmul.mubr.f32.gmra.mrb[0].mxu0 %v653
        %v736 = vpop.f32.mrb[0].mxu0
        %v737 = vadd.f32 %v534, %v736
        %v738 = vpop.f32.mrb[0].mxu0
        %739 = vmatprep.mubr.f32.mxu0 0.0
        %740 = vmatmul.mubr.f32.gmra.mrb[0].mxu0 %v656
        %v741 = vpop.f32.mrb[0].mxu0
        %v742 = vadd.f32 %v539, %v741
        %v743 = vpop.f32.mrb[0].mxu0
        %744 = vmatprep.mubr.f32.mxu0 0.0
        %745 = vmatmul.mubr.f32.gmra.mrb[0].mxu0 %v659
        %v746 = vpop.f32.mrb[0].mxu0
        %v747 = vadd.f32 %v544, %v746
        %v748 = vpop.f32.mrb[0].mxu0
        %749 = vdwg.mxu0
        %v750 = vld [vmem:[%s6] sm:$0x1]
        %v752 = vlaneseq
        %v753 = vshrl.u32 %v752, 7
        %v754 = vsub.s32 0, %v753
        %v755 = vrot.slane %v750, %v754
        %v757 = vadd.f32 %v732, %v755
        %v758 = vadd.f32 %v737, %v755
        %v759 = vadd.f32 %v742, %v755
        %v760 = vadd.f32 %v747, %v755
        %v765 = vcombine.high %v757, %v757
        %v767 = vunpack.c.l.s4 1966171168
        %v768 = vunpack.c.0.s8 %v767
        %v769 = vlaneseq
        %v770 = vshrl.u32 %v769, 7
        %v771 = vsub.s32 %v768, %v770
        %v772 = vrot.slane %v757, %v771
        %v774 = vunpack.c.l.s4 1966171168
        %v775 = vunpack.c.0.s8 %v774
        %v776 = vlaneseq
        %v777 = vshrl.u32 %v776, 7
        %v778 = vsub.s32 %v775, %v777
        %v779 = vrot.slane %v765, %v778
        %v780 = vcombine.high %v772, %v772
        %v781 = vcombine.high %v779, %v779
        %v783 = vunpack.c.l.s4 1966171168
        %v784 = vunpack.c.0.s8 %v783
        %v785 = vlaneseq
        %v786 = vshrl.u32 %v785, 7
        %v787 = vsub.s32 %v784, %v786
        %v788 = vrot.slane %v772, %v787
        %v790 = vunpack.c.l.s4 1966171168
        %v791 = vunpack.c.0.s8 %v790
        %v792 = vlaneseq
        %v793 = vshrl.u32 %v792, 7
        %v794 = vsub.s32 %v791, %v793
        %v795 = vrot.slane %v779, %v794
        %v797 = vunpack.c.l.s4 1966171168
        %v798 = vunpack.c.0.s8 %v797
        %v799 = vlaneseq
        %v800 = vshrl.u32 %v799, 7
        %v801 = vsub.s32 %v798, %v800
        %v802 = vrot.slane %v780, %v801
        %v804 = vunpack.c.l.s4 1966171168
        %v805 = vunpack.c.0.s8 %v804
        %v806 = vlaneseq
        %v807 = vshrl.u32 %v806, 7
        %v808 = vsub.s32 %v805, %v807
        %v809 = vrot.slane %v781, %v808
        %v810 = vcombine.high %v788, %v788
        %v811 = vcombine.high %v795, %v795
        %v812 = vcombine.high %v802, %v802
        %v813 = vcombine.high %v809, %v809
        %v814 = vcombine.high %v758, %v758
        %v816 = vunpack.c.l.s4 1966171168
        %v817 = vunpack.c.0.s8 %v816
        %v818 = vlaneseq
        %v819 = vshrl.u32 %v818, 7
        %v820 = vsub.s32 %v817, %v819
        %v821 = vrot.slane %v758, %v820
        %v823 = vunpack.c.l.s4 1966171168
        %v824 = vunpack.c.0.s8 %v823
        %v825 = vlaneseq
        %v826 = vshrl.u32 %v825, 7
        %v827 = vsub.s32 %v824, %v826
        %v828 = vrot.slane %v814, %v827
        %v829 = vcombine.high %v821, %v821
        %v830 = vcombine.high %v828, %v828
        %v832 = vunpack.c.l.s4 1966171168
        %v833 = vunpack.c.0.s8 %v832
        %v834 = vlaneseq
        %v835 = vshrl.u32 %v834, 7
        %v836 = vsub.s32 %v833, %v835
        %v837 = vrot.slane %v821, %v836
        %v839 = vunpack.c.l.s4 1966171168
        %v840 = vunpack.c.0.s8 %v839
        %v841 = vlaneseq
        %v842 = vshrl.u32 %v841, 7
        %v843 = vsub.s32 %v840, %v842
        %v844 = vrot.slane %v828, %v843
        %v846 = vunpack.c.l.s4 1966171168
        %v847 = vunpack.c.0.s8 %v846
        %v848 = vlaneseq
        %v849 = vshrl.u32 %v848, 7
        %v850 = vsub.s32 %v847, %v849
        %v851 = vrot.slane %v829, %v850
        %v853 = vunpack.c.l.s4 1966171168
        %v854 = vunpack.c.0.s8 %v853
        %v855 = vlaneseq
        %v856 = vshrl.u32 %v855, 7
        %v857 = vsub.s32 %v854, %v856
        %v858 = vrot.slane %v830, %v857
        %v859 = vcombine.high %v837, %v837
        %v860 = vcombine.high %v844, %v844
        %v861 = vcombine.high %v851, %v851
        %v862 = vcombine.high %v858, %v858
        %v863 = vcombine.high %v759, %v759
        %v865 = vunpack.c.l.s4 1966171168
        %v866 = vunpack.c.0.s8 %v865
        %v867 = vlaneseq
        %v868 = vshrl.u32 %v867, 7
        %v869 = vsub.s32 %v866, %v868
        %v870 = vrot.slane %v759, %v869
        %v872 = vunpack.c.l.s4 1966171168
        %v873 = vunpack.c.0.s8 %v872
        %v874 = vlaneseq
        %v875 = vshrl.u32 %v874, 7
        %v876 = vsub.s32 %v873, %v875
        %v877 = vrot.slane %v863, %v876
        %v878 = vcombine.high %v870, %v870
        %v879 = vcombine.high %v877, %v877
        %v881 = vunpack.c.l.s4 1966171168
        %v882 = vunpack.c.0.s8 %v881
        %v883 = vlaneseq
        %v884 = vshrl.u32 %v883, 7
        %v885 = vsub.s32 %v882, %v884
        %v886 = vrot.slane %v870, %v885
        %v888 = vunpack.c.l.s4 1966171168
        %v889 = vunpack.c.0.s8 %v888
        %v890 = vlaneseq
        %v891 = vshrl.u32 %v890, 7
        %v892 = vsub.s32 %v889, %v891
        %v893 = vrot.slane %v877, %v892
        %v895 = vunpack.c.l.s4 1966171168
        %v896 = vunpack.c.0.s8 %v895
        %v897 = vlaneseq
        %v898 = vshrl.u32 %v897, 7
        %v899 = vsub.s32 %v896, %v898
        %v900 = vrot.slane %v878, %v899
        %v902 = vunpack.c.l.s4 1966171168
        %v903 = vunpack.c.0.s8 %v902
        %v904 = vlaneseq
        %v905 = vshrl.u32 %v904, 7
        %v906 = vsub.s32 %v903, %v905
        %v907 = vrot.slane %v879, %v906
        %v908 = vcombine.high %v886, %v886
        %v909 = vcombine.high %v893, %v893
        %v910 = vcombine.high %v900, %v900
        %v911 = vcombine.high %v907, %v907
        %v912 = vcombine.high %v760, %v760
        %v914 = vunpack.c.l.s4 1966171168
        %v915 = vunpack.c.0.s8 %v914
        %v916 = vlaneseq
        %v917 = vshrl.u32 %v916, 7
        %v918 = vsub.s32 %v915, %v917
        %v919 = vrot.slane %v760, %v918
        %v921 = vunpack.c.l.s4 1966171168
        %v922 = vunpack.c.0.s8 %v921
        %v923 = vlaneseq
        %v924 = vshrl.u32 %v923, 7
        %v925 = vsub.s32 %v922, %v924
        %v926 = vrot.slane %v912, %v925
        %v927 = vcombine.high %v919, %v919
        %v928 = vcombine.high %v926, %v926
        %v930 = vunpack.c.l.s4 1966171168
        %v931 = vunpack.c.0.s8 %v930
        %v932 = vlaneseq
        %v933 = vshrl.u32 %v932, 7
        %v934 = vsub.s32 %v931, %v933
        %v935 = vrot.slane %v919, %v934
        %v937 = vunpack.c.l.s4 1966171168
        %v938 = vunpack.c.0.s8 %v937
        %v939 = vlaneseq
        %v940 = vshrl.u32 %v939, 7
        %v941 = vsub.s32 %v938, %v940
        %v942 = vrot.slane %v926, %v941
        %v944 = vunpack.c.l.s4 1966171168
        %v945 = vunpack.c.0.s8 %v944
        %v946 = vlaneseq
        %v947 = vshrl.u32 %v946, 7
        %v948 = vsub.s32 %v945, %v947
        %v949 = vrot.slane %v927, %v948
        %v951 = vunpack.c.l.s4 1966171168
        %v952 = vunpack.c.0.s8 %v951
        %v953 = vlaneseq
        %v954 = vshrl.u32 %v953, 7
        %v955 = vsub.s32 %v952, %v954
        %v956 = vrot.slane %v928, %v955
        %v957 = vcombine.high %v935, %v935
        %v958 = vcombine.high %v942, %v942
        %v959 = vcombine.high %v949, %v949
        %v960 = vcombine.high %v956, %v956
        %v961 = vlaneseq
        %v962 = vshrl.u32 %v961, 7
        %v963 = vsub.s32 0, %v962
        %v964 = vrot.slane %v788, %v963
        %v965 = vlaneseq
        %v966 = vshrl.u32 %v965, 7
        %v967 = vsub.s32 0, %v966
        %v968 = vrot.slane %v802, %v967
        %v969 = vlaneseq
        %v970 = vshrl.u32 %v969, 7
        %v971 = vsub.s32 0, %v970
        %v972 = vrot.slane %v810, %v971
        %v973 = vlaneseq
        %v974 = vshrl.u32 %v973, 7
        %v975 = vsub.s32 0, %v974
        %v976 = vrot.slane %v812, %v975
        %v977 = vlaneseq
        %v978 = vshrl.u32 %v977, 7
        %v979 = vsub.s32 0, %v978
        %v980 = vrot.slane %v795, %v979
        %v981 = vlaneseq
        %v982 = vshrl.u32 %v981, 7
        %v983 = vsub.s32 0, %v982
        %v984 = vrot.slane %v809, %v983
        %v985 = vlaneseq
        %v986 = vshrl.u32 %v985, 7
        %v987 = vsub.s32 0, %v986
        %v988 = vrot.slane %v811, %v987
        %v989 = vlaneseq
        %v990 = vshrl.u32 %v989, 7
        %v991 = vsub.s32 0, %v990
        %v992 = vrot.slane %v813, %v991
        %v993 = vlaneseq
        %v994 = vshrl.u32 %v993, 7
        %v995 = vsub.s32 0, %v994
        %v996 = vrot.slane %v837, %v995
        %v997 = vlaneseq
        %v998 = vshrl.u32 %v997, 7
        %v999 = vsub.s32 0, %v998
        %v1000 = vrot.slane %v851, %v999
        %v1001 = vlaneseq
        %v1002 = vshrl.u32 %v1001, 7
        %v1003 = vsub.s32 0, %v1002
        %v1004 = vrot.slane %v859, %v1003
        %v1005 = vlaneseq
        %v1006 = vshrl.u32 %v1005, 7
        %v1007 = vsub.s32 0, %v1006
        %v1008 = vrot.slane %v861, %v1007
        %v1009 = vlaneseq
        %v1010 = vshrl.u32 %v1009, 7
        %v1011 = vsub.s32 0, %v1010
        %v1012 = vrot.slane %v844, %v1011
        %v1013 = vlaneseq
        %v1014 = vshrl.u32 %v1013, 7
        %v1015 = vsub.s32 0, %v1014
        %v1016 = vrot.slane %v858, %v1015
        %v1017 = vlaneseq
        %v1018 = vshrl.u32 %v1017, 7
        %v1019 = vsub.s32 0, %v1018
        %v1020 = vrot.slane %v860, %v1019
        %v1021 = vlaneseq
        %v1022 = vshrl.u32 %v1021, 7
        %v1023 = vsub.s32 0, %v1022
        %v1024 = vrot.slane %v862, %v1023
        %v1025 = vlaneseq
        %v1026 = vshrl.u32 %v1025, 7
        %v1027 = vsub.s32 0, %v1026
        %v1028 = vrot.slane %v886, %v1027
        %v1029 = vlaneseq
        %v1030 = vshrl.u32 %v1029, 7
        %v1031 = vsub.s32 0, %v1030
        %v1032 = vrot.slane %v900, %v1031
        %v1033 = vlaneseq
        %v1034 = vshrl.u32 %v1033, 7
        %v1035 = vsub.s32 0, %v1034
        %v1036 = vrot.slane %v908, %v1035
        %v1037 = vlaneseq
        %v1038 = vshrl.u32 %v1037, 7
        %v1039 = vsub.s32 0, %v1038
        %v1040 = vrot.slane %v910, %v1039
        %v1041 = vlaneseq
        %v1042 = vshrl.u32 %v1041, 7
        %v1043 = vsub.s32 0, %v1042
        %v1044 = vrot.slane %v893, %v1043
        %v1045 = vlaneseq
        %v1046 = vshrl.u32 %v1045, 7
        %v1047 = vsub.s32 0, %v1046
        %v1048 = vrot.slane %v907, %v1047
        %v1049 = vlaneseq
        %v1050 = vshrl.u32 %v1049, 7
        %v1051 = vsub.s32 0, %v1050
        %v1052 = vrot.slane %v909, %v1051
        %v1053 = vlaneseq
        %v1054 = vshrl.u32 %v1053, 7
        %v1055 = vsub.s32 0, %v1054
        %v1056 = vrot.slane %v911, %v1055
        %v1057 = vlaneseq
        %v1058 = vshrl.u32 %v1057, 7
        %v1059 = vsub.s32 0, %v1058
        %v1060 = vrot.slane %v935, %v1059
        %v1061 = vlaneseq
        %v1062 = vshrl.u32 %v1061, 7
        %v1063 = vsub.s32 0, %v1062
        %v1064 = vrot.slane %v949, %v1063
        %v1065 = vlaneseq
        %v1066 = vshrl.u32 %v1065, 7
        %v1067 = vsub.s32 0, %v1066
        %v1068 = vrot.slane %v957, %v1067
        %v1069 = vlaneseq
        %v1070 = vshrl.u32 %v1069, 7
        %v1071 = vsub.s32 0, %v1070
        %v1072 = vrot.slane %v959, %v1071
        %v1073 = vlaneseq
        %v1074 = vshrl.u32 %v1073, 7
        %v1075 = vsub.s32 0, %v1074
        %v1076 = vrot.slane %v942, %v1075
        %v1077 = vlaneseq
        %v1078 = vshrl.u32 %v1077, 7
        %v1079 = vsub.s32 0, %v1078
        %v1080 = vrot.slane %v956, %v1079
        %v1081 = vlaneseq
        %v1082 = vshrl.u32 %v1081, 7
        %v1083 = vsub.s32 0, %v1082
        %v1084 = vrot.slane %v958, %v1083
        %v1085 = vlaneseq
        %v1086 = vshrl.u32 %v1085, 7
        %v1087 = vsub.s32 0, %v1086
        %v1088 = vrot.slane %v960, %v1087
        %v1121 = vsub.f32 %v964, %v630
        %v1122 = vsub.f32 %v964, %v635
        %v1123 = vsub.f32 %v964, %v640
        %v1124 = vsub.f32 %v964, %v645
        %v1125 = vsub.f32 %v968, %v630
        %v1126 = vsub.f32 %v968, %v635
        %v1127 = vsub.f32 %v968, %v640
        %v1128 = vsub.f32 %v968, %v645
        %v1129 = vsub.f32 %v972, %v630
        %v1130 = vsub.f32 %v972, %v635
        %v1131 = vsub.f32 %v972, %v640
        %v1132 = vsub.f32 %v972, %v645
        %v1133 = vsub.f32 %v976, %v630
        %v1134 = vsub.f32 %v976, %v635
        %v1135 = vsub.f32 %v976, %v640
        %v1136 = vsub.f32 %v976, %v645
        %v1137 = vsub.f32 %v980, %v630
        %v1138 = vsub.f32 %v980, %v635
        %v1139 = vsub.f32 %v980, %v640
        %v1140 = vsub.f32 %v980, %v645
        %v1141 = vsub.f32 %v984, %v630
        %v1142 = vsub.f32 %v984, %v635
        %v1143 = vsub.f32 %v984, %v640
        %v1144 = vsub.f32 %v984, %v645
        %v1145 = vsub.f32 %v988, %v630
        %v1146 = vsub.f32 %v988, %v635
        %v1147 = vsub.f32 %v988, %v640
        %v1148 = vsub.f32 %v988, %v645
        %v1149 = vsub.f32 %v992, %v630
        %v1150 = vsub.f32 %v992, %v635
        %v1151 = vsub.f32 %v992, %v640
        %v1152 = vsub.f32 %v992, %v645
        %v1153 = vsub.f32 %v996, %v630
        %v1154 = vsub.f32 %v996, %v635
        %v1155 = vsub.f32 %v996, %v640
        %v1156 = vsub.f32 %v996, %v645
        %v1157 = vsub.f32 %v1000, %v630
        %v1158 = vsub.f32 %v1000, %v635
        %v1159 = vsub.f32 %v1000, %v640
        %v1160 = vsub.f32 %v1000, %v645
        %v1161 = vsub.f32 %v1004, %v630
        %v1162 = vsub.f32 %v1004, %v635
        %v1163 = vsub.f32 %v1004, %v640
        %v1164 = vsub.f32 %v1004, %v645
        %v1165 = vsub.f32 %v1008, %v630
        %v1166 = vsub.f32 %v1008, %v635
        %v1167 = vsub.f32 %v1008, %v640
        %v1168 = vsub.f32 %v1008, %v645
        %v1169 = vsub.f32 %v1012, %v630
        %v1170 = vsub.f32 %v1012, %v635
        %v1171 = vsub.f32 %v1012, %v640
        %v1172 = vsub.f32 %v1012, %v645
        %v1173 = vsub.f32 %v1016, %v630
        %v1174 = vsub.f32 %v1016, %v635
        %v1175 = vsub.f32 %v1016, %v640
        %v1176 = vsub.f32 %v1016, %v645
        %v1177 = vsub.f32 %v1020, %v630
        %v1178 = vsub.f32 %v1020, %v635
        %v1179 = vsub.f32 %v1020, %v640
        %v1180 = vsub.f32 %v1020, %v645
        %v1181 = vsub.f32 %v1024, %v630
        %v1182 = vsub.f32 %v1024, %v635
        %v1183 = vsub.f32 %v1024, %v640
        %v1184 = vsub.f32 %v1024, %v645
        %v1185 = vsub.f32 %v1028, %v630
        %v1186 = vsub.f32 %v1028, %v635
        %v1187 = vsub.f32 %v1028, %v640
        %v1188 = vsub.f32 %v1028, %v645
        %v1189 = vsub.f32 %v1032, %v630
        %v1190 = vsub.f32 %v1032, %v635
        %v1191 = vsub.f32 %v1032, %v640
        %v1192 = vsub.f32 %v1032, %v645
        %v1193 = vsub.f32 %v1036, %v630
        %v1194 = vsub.f32 %v1036, %v635
        %v1195 = vsub.f32 %v1036, %v640
        %v1196 = vsub.f32 %v1036, %v645
        %v1197 = vsub.f32 %v1040, %v630
        %v1198 = vsub.f32 %v1040, %v635
        %v1199 = vsub.f32 %v1040, %v640
        %v1200 = vsub.f32 %v1040, %v645
        %v1201 = vsub.f32 %v1044, %v630
        %v1202 = vsub.f32 %v1044, %v635
        %v1203 = vsub.f32 %v1044, %v640
        %v1204 = vsub.f32 %v1044, %v645
        %v1205 = vsub.f32 %v1048, %v630
        %v1206 = vsub.f32 %v1048, %v635
        %v1207 = vsub.f32 %v1048, %v640
        %v1208 = vsub.f32 %v1048, %v645
        %v1209 = vsub.f32 %v1052, %v630
        %v1210 = vsub.f32 %v1052, %v635
        %v1211 = vsub.f32 %v1052, %v640
        %v1212 = vsub.f32 %v1052, %v645
        %v1213 = vsub.f32 %v1056, %v630
        %v1214 = vsub.f32 %v1056, %v635
        %v1215 = vsub.f32 %v1056, %v640
        %v1216 = vsub.f32 %v1056, %v645
        %v1217 = vsub.f32 %v1060, %v630
        %v1218 = vsub.f32 %v1060, %v635
        %v1219 = vsub.f32 %v1060, %v640
        %v1220 = vsub.f32 %v1060, %v645
        %v1221 = vsub.f32 %v1064, %v630
        %v1222 = vsub.f32 %v1064, %v635
        %v1223 = vsub.f32 %v1064, %v640
        %v1224 = vsub.f32 %v1064, %v645
        %v1225 = vsub.f32 %v1068, %v630
        %v1226 = vsub.f32 %v1068, %v635
        %v1227 = vsub.f32 %v1068, %v640
        %v1228 = vsub.f32 %v1068, %v645
        %v1229 = vsub.f32 %v1072, %v630
        %v1230 = vsub.f32 %v1072, %v635
        %v1231 = vsub.f32 %v1072, %v640
        %v1232 = vsub.f32 %v1072, %v645
        %v1233 = vsub.f32 %v1076, %v630
        %v1234 = vsub.f32 %v1076, %v635
        %v1235 = vsub.f32 %v1076, %v640
        %v1236 = vsub.f32 %v1076, %v645
        %v1237 = vsub.f32 %v1080, %v630
        %v1238 = vsub.f32 %v1080, %v635
        %v1239 = vsub.f32 %v1080, %v640
        %v1240 = vsub.f32 %v1080, %v645
        %v1241 = vsub.f32 %v1084, %v630
        %v1242 = vsub.f32 %v1084, %v635
        %v1243 = vsub.f32 %v1084, %v640
        %v1244 = vsub.f32 %v1084, %v645
        %v1245 = vsub.f32 %v1088, %v630
        %v1246 = vsub.f32 %v1088, %v635
        %v1247 = vsub.f32 %v1088, %v640
        %v1248 = vsub.f32 %v1088, %v645
        %v1249 = vmax.f32 %v1121, 0.0
        %v1250 = vmax.f32 %v1122, 0.0
        %v1251 = vmax.f32 %v1123, 0.0
        %v1252 = vmax.f32 %v1124, 0.0
        %v1253 = vmax.f32 %v1125, 0.0
        %v1254 = vmax.f32 %v1126, 0.0
        %v1255 = vmax.f32 %v1127, 0.0
        %v1256 = vmax.f32 %v1128, 0.0
        %v1257 = vmax.f32 %v1129, 0.0
        %v1258 = vmax.f32 %v1130, 0.0
        %v1259 = vmax.f32 %v1131, 0.0
        %v1260 = vmax.f32 %v1132, 0.0
        %v1261 = vmax.f32 %v1133, 0.0
        %v1262 = vmax.f32 %v1134, 0.0
        %v1263 = vmax.f32 %v1135, 0.0
        %v1264 = vmax.f32 %v1136, 0.0
        %v1265 = vmax.f32 %v1137, 0.0
        %v1266 = vmax.f32 %v1138, 0.0
        %v1267 = vmax.f32 %v1139, 0.0
        %v1268 = vmax.f32 %v1140, 0.0
        %v1269 = vmax.f32 %v1141, 0.0
        %v1270 = vmax.f32 %v1142, 0.0
        %v1271 = vmax.f32 %v1143, 0.0
        %v1272 = vmax.f32 %v1144, 0.0
        %v1273 = vmax.f32 %v1145, 0.0
        %v1274 = vmax.f32 %v1146, 0.0
        %v1275 = vmax.f32 %v1147, 0.0
        %v1276 = vmax.f32 %v1148, 0.0
        %v1277 = vmax.f32 %v1149, 0.0
        %v1278 = vmax.f32 %v1150, 0.0
        %v1279 = vmax.f32 %v1151, 0.0
        %v1280 = vmax.f32 %v1152, 0.0
        %v1281 = vmax.f32 %v1153, 0.0
        %v1282 = vmax.f32 %v1154, 0.0
        %v1283 = vmax.f32 %v1155, 0.0
        %v1284 = vmax.f32 %v1156, 0.0
        %v1285 = vmax.f32 %v1157, 0.0
        %v1286 = vmax.f32 %v1158, 0.0
        %v1287 = vmax.f32 %v1159, 0.0
        %v1288 = vmax.f32 %v1160, 0.0
        %v1289 = vmax.f32 %v1161, 0.0
        %v1290 = vmax.f32 %v1162, 0.0
        %v1291 = vmax.f32 %v1163, 0.0
        %v1292 = vmax.f32 %v1164, 0.0
        %v1293 = vmax.f32 %v1165, 0.0
        %v1294 = vmax.f32 %v1166, 0.0
        %v1295 = vmax.f32 %v1167, 0.0
        %v1296 = vmax.f32 %v1168, 0.0
        %v1297 = vmax.f32 %v1169, 0.0
        %v1298 = vmax.f32 %v1170, 0.0
        %v1299 = vmax.f32 %v1171, 0.0
        %v1300 = vmax.f32 %v1172, 0.0
        %v1301 = vmax.f32 %v1173, 0.0
        %v1302 = vmax.f32 %v1174, 0.0
        %v1303 = vmax.f32 %v1175, 0.0
        %v1304 = vmax.f32 %v1176, 0.0
        %v1305 = vmax.f32 %v1177, 0.0
        %v1306 = vmax.f32 %v1178, 0.0
        %v1307 = vmax.f32 %v1179, 0.0
        %v1308 = vmax.f32 %v1180, 0.0
        %v1309 = vmax.f32 %v1181, 0.0
        %v1310 = vmax.f32 %v1182, 0.0
        %v1311 = vmax.f32 %v1183, 0.0
        %v1312 = vmax.f32 %v1184, 0.0
        %v1313 = vmax.f32 %v1185, 0.0
        %v1314 = vmax.f32 %v1186, 0.0
        %v1315 = vmax.f32 %v1187, 0.0
        %v1316 = vmax.f32 %v1188, 0.0
        %v1317 = vmax.f32 %v1189, 0.0
        %v1318 = vmax.f32 %v1190, 0.0
        %v1319 = vmax.f32 %v1191, 0.0
        %v1320 = vmax.f32 %v1192, 0.0
        %v1321 = vmax.f32 %v1193, 0.0
        %v1322 = vmax.f32 %v1194, 0.0
        %v1323 = vmax.f32 %v1195, 0.0
        %v1324 = vmax.f32 %v1196, 0.0
        %v1325 = vmax.f32 %v1197, 0.0
        %v1326 = vmax.f32 %v1198, 0.0
        %v1327 = vmax.f32 %v1199, 0.0
        %v1328 = vmax.f32 %v1200, 0.0
        %v1329 = vmax.f32 %v1201, 0.0
        %v1330 = vmax.f32 %v1202, 0.0
        %v1331 = vmax.f32 %v1203, 0.0
        %v1332 = vmax.f32 %v1204, 0.0
        %v1333 = vmax.f32 %v1205, 0.0
        %v1334 = vmax.f32 %v1206, 0.0
        %v1335 = vmax.f32 %v1207, 0.0
        %v1336 = vmax.f32 %v1208, 0.0
        %v1337 = vmax.f32 %v1209, 0.0
        %v1338 = vmax.f32 %v1210, 0.0
        %v1339 = vmax.f32 %v1211, 0.0
        %v1340 = vmax.f32 %v1212, 0.0
        %v1341 = vmax.f32 %v1213, 0.0
        %v1342 = vmax.f32 %v1214, 0.0
        %v1343 = vmax.f32 %v1215, 0.0
        %v1344 = vmax.f32 %v1216, 0.0
        %v1345 = vmax.f32 %v1217, 0.0
        %v1346 = vmax.f32 %v1218, 0.0
        %v1347 = vmax.f32 %v1219, 0.0
        %v1348 = vmax.f32 %v1220, 0.0
        %v1349 = vmax.f32 %v1221, 0.0
        %v1350 = vmax.f32 %v1222, 0.0
        %v1351 = vmax.f32 %v1223, 0.0
        %v1352 = vmax.f32 %v1224, 0.0
        %v1353 = vmax.f32 %v1225, 0.0
        %v1354 = vmax.f32 %v1226, 0.0
        %v1355 = vmax.f32 %v1227, 0.0
        %v1356 = vmax.f32 %v1228, 0.0
        %v1357 = vmax.f32 %v1229, 0.0
        %v1358 = vmax.f32 %v1230, 0.0
        %v1359 = vmax.f32 %v1231, 0.0
        %v1360 = vmax.f32 %v1232, 0.0
        %v1361 = vmax.f32 %v1233, 0.0
        %v1362 = vmax.f32 %v1234, 0.0
        %v1363 = vmax.f32 %v1235, 0.0
        %v1364 = vmax.f32 %v1236, 0.0
        %v1365 = vmax.f32 %v1237, 0.0
        %v1366 = vmax.f32 %v1238, 0.0
        %v1367 = vmax.f32 %v1239, 0.0
        %v1368 = vmax.f32 %v1240, 0.0
        %v1369 = vmax.f32 %v1241, 0.0
        %v1370 = vmax.f32 %v1242, 0.0
        %v1371 = vmax.f32 %v1243, 0.0
        %v1372 = vmax.f32 %v1244, 0.0
        %v1373 = vmax.f32 %v1245, 0.0
        %v1374 = vmax.f32 %v1246, 0.0
        %v1375 = vmax.f32 %v1247, 0.0
        %v1376 = vmax.f32 %v1248, 0.0
        %v1377 = vpack.c.bf16 %v1250, %v1249
        %v1378 = vpack.c.bf16 %v1252, %v1251
        %v1379 = vpack.c.bf16 %v1254, %v1253
        %v1380 = vpack.c.bf16 %v1256, %v1255
        %v1381 = vpack.c.bf16 %v1258, %v1257
        %v1382 = vpack.c.bf16 %v1260, %v1259
        %v1383 = vpack.c.bf16 %v1262, %v1261
        %v1384 = vpack.c.bf16 %v1264, %v1263
        %v1385 = vpack.c.bf16 %v1266, %v1265
        %v1386 = vpack.c.bf16 %v1268, %v1267
        %v1387 = vpack.c.bf16 %v1270, %v1269
        %v1388 = vpack.c.bf16 %v1272, %v1271
        %v1389 = vpack.c.bf16 %v1274, %v1273
        %v1390 = vpack.c.bf16 %v1276, %v1275
        %v1391 = vpack.c.bf16 %v1278, %v1277
        %v1392 = vpack.c.bf16 %v1280, %v1279
        %v1393 = vpack.c.bf16 %v1282, %v1281
        %v1394 = vpack.c.bf16 %v1284, %v1283
        %v1395 = vpack.c.bf16 %v1286, %v1285
        %v1396 = vpack.c.bf16 %v1288, %v1287
        %v1397 = vpack.c.bf16 %v1290, %v1289
        %v1398 = vpack.c.bf16 %v1292, %v1291
        %v1399 = vpack.c.bf16 %v1294, %v1293
        %v1400 = vpack.c.bf16 %v1296, %v1295
        %v1401 = vpack.c.bf16 %v1298, %v1297
        %v1402 = vpack.c.bf16 %v1300, %v1299
        %v1403 = vpack.c.bf16 %v1302, %v1301
        %v1404 = vpack.c.bf16 %v1304, %v1303
        %v1405 = vpack.c.bf16 %v1306, %v1305
        %v1406 = vpack.c.bf16 %v1308, %v1307
        %v1407 = vpack.c.bf16 %v1310, %v1309
        %v1408 = vpack.c.bf16 %v1312, %v1311
        %v1409 = vpack.c.bf16 %v1314, %v1313
        %v1410 = vpack.c.bf16 %v1316, %v1315
        %v1411 = vpack.c.bf16 %v1318, %v1317
        %v1412 = vpack.c.bf16 %v1320, %v1319
        %v1413 = vpack.c.bf16 %v1322, %v1321
        %v1414 = vpack.c.bf16 %v1324, %v1323
        %v1415 = vpack.c.bf16 %v1326, %v1325
        %v1416 = vpack.c.bf16 %v1328, %v1327
        %v1417 = vpack.c.bf16 %v1330, %v1329
        %v1418 = vpack.c.bf16 %v1332, %v1331
        %v1419 = vpack.c.bf16 %v1334, %v1333
        %v1420 = vpack.c.bf16 %v1336, %v1335
        %v1421 = vpack.c.bf16 %v1338, %v1337
        %v1422 = vpack.c.bf16 %v1340, %v1339
        %v1423 = vpack.c.bf16 %v1342, %v1341
        %v1424 = vpack.c.bf16 %v1344, %v1343
        %v1425 = vpack.c.bf16 %v1346, %v1345
        %v1426 = vpack.c.bf16 %v1348, %v1347
        %v1427 = vpack.c.bf16 %v1350, %v1349
        %v1428 = vpack.c.bf16 %v1352, %v1351
        %v1429 = vpack.c.bf16 %v1354, %v1353
        %v1430 = vpack.c.bf16 %v1356, %v1355
        %v1431 = vpack.c.bf16 %v1358, %v1357
        %v1432 = vpack.c.bf16 %v1360, %v1359
        %v1433 = vpack.c.bf16 %v1362, %v1361
        %v1434 = vpack.c.bf16 %v1364, %v1363
        %v1435 = vpack.c.bf16 %v1366, %v1365
        %v1436 = vpack.c.bf16 %v1368, %v1367
        %v1437 = vpack.c.bf16 %v1370, %v1369
        %v1438 = vpack.c.bf16 %v1372, %v1371
        %v1439 = vpack.c.bf16 %v1374, %v1373
        %v1440 = vpack.c.bf16 %v1376, %v1375
        %v1441 = vld [vmem:[%s7] sm:$0xf]
        %v1442 = vld [vmem:[%s7 + $0x4] sm:$0xf]
        %v1443 = vld [vmem:[%s7 + $0x8] sm:$0xf]
        %v1444 = vld [vmem:[%s7 + $0xc] sm:$0xf]
        %v1445 = vld [vmem:[%s8] sm:$0x1]
        %v1447 = vlaneseq
        %v1448 = vshrl.u32 %v1447, 7
        %v1449 = vsub.s32 0, %v1448
        %v1450 = vrot.slane %v1445, %v1449
        %v1456 = vunpack.c.l.b16 %v1441
        %v1457 = vunpack.c.l.b16 %v1442
        %v1458 = vunpack.c.l.b16 %v1443
        %v1459 = vunpack.c.l.b16 %v1444
        %v1460 = vpack.c.b16 %v1457, %v1456
        %v1461 = vpack.c.b16 %v1459, %v1458
        %vm1464 = vcmask 261120
        %v1466 = vsel %vm1464, %v1377, 0
        %v1469 = vsel %vm1464, %v1378, 0
        %v1472 = vsel %vm1464, %v1379, 0
        %v1475 = vsel %vm1464, %v1380, 0
        %v1478 = vsel %vm1464, %v1381, 0
        %v1481 = vsel %vm1464, %v1382, 0
        %v1484 = vsel %vm1464, %v1383, 0
        %v1487 = vsel %vm1464, %v1384, 0
        %v1490 = vsel %vm1464, %v1385, 0
        %v1493 = vsel %vm1464, %v1386, 0
        %v1496 = vsel %vm1464, %v1387, 0
        %v1499 = vsel %vm1464, %v1388, 0
        %v1502 = vsel %vm1464, %v1389, 0
        %v1505 = vsel %vm1464, %v1390, 0
        %v1508 = vsel %vm1464, %v1391, 0
        %v1511 = vsel %vm1464, %v1392, 0
        %v1514 = vsel %vm1464, %v1393, 0
        %v1517 = vsel %vm1464, %v1394, 0
        %v1520 = vsel %vm1464, %v1395, 0
        %v1523 = vsel %vm1464, %v1396, 0
        %v1526 = vsel %vm1464, %v1397, 0
        %v1529 = vsel %vm1464, %v1398, 0
        %v1532 = vsel %vm1464, %v1399, 0
        %v1535 = vsel %vm1464, %v1400, 0
        %v1538 = vsel %vm1464, %v1401, 0
        %v1541 = vsel %vm1464, %v1402, 0
        %v1544 = vsel %vm1464, %v1403, 0
        %v1547 = vsel %vm1464, %v1404, 0
        %v1550 = vsel %vm1464, %v1405, 0
        %v1553 = vsel %vm1464, %v1406, 0
        %v1556 = vsel %vm1464, %v1407, 0
        %v1559 = vsel %vm1464, %v1408, 0
        %v1562 = vsel %vm1464, %v1409, 0
        %v1565 = vsel %vm1464, %v1410, 0
        %v1568 = vsel %vm1464, %v1411, 0
        %v1571 = vsel %vm1464, %v1412, 0
        %v1574 = vsel %vm1464, %v1413, 0
        %v1577 = vsel %vm1464, %v1414, 0
        %v1580 = vsel %vm1464, %v1415, 0
        %v1583 = vsel %vm1464, %v1416, 0
        %v1586 = vsel %vm1464, %v1417, 0
        %v1589 = vsel %vm1464, %v1418, 0
        %v1592 = vsel %vm1464, %v1419, 0
        %v1595 = vsel %vm1464, %v1420, 0
        %v1598 = vsel %vm1464, %v1421, 0
        %v1601 = vsel %vm1464, %v1422, 0
        %v1604 = vsel %vm1464, %v1423, 0
        %v1607 = vsel %vm1464, %v1424, 0
        %v1610 = vsel %vm1464, %v1425, 0
        %v1613 = vsel %vm1464, %v1426, 0
        %v1616 = vsel %vm1464, %v1427, 0
        %v1619 = vsel %vm1464, %v1428, 0
        %v1622 = vsel %vm1464, %v1429, 0
        %v1625 = vsel %vm1464, %v1430, 0
        %v1628 = vsel %vm1464, %v1431, 0
        %v1631 = vsel %vm1464, %v1432, 0
        %v1634 = vsel %vm1464, %v1433, 0
        %v1637 = vsel %vm1464, %v1434, 0
        %v1640 = vsel %vm1464, %v1435, 0
        %v1643 = vsel %vm1464, %v1436, 0
        %v1646 = vsel %vm1464, %v1437, 0
        %v1649 = vsel %vm1464, %v1438, 0
        %v1652 = vsel %vm1464, %v1439, 0
        %v1655 = vsel %vm1464, %v1440, 0
        %1657 = vmatprep.subr.bf16.mxu0 0
        %1658 = vmatpush1.bf16.msra.mxu0 %v1460
        %1659 = vmatprep.subr.bf16.mxu0 0
        %1660 = vmatpush1.bf16.msra.mxu0 %v1461
        %1661 = vmatprep.subr.bf16.mxu0 0
        %1662 = vmatpush1.bf16.msra.mxu0 0
        %1663 = vmatprep.subr.bf16.mxu0 0
        %1664 = vmatpush1.bf16.msra.mxu0 0
        %1665 = vmatprep.subr.bf16.mxu0 0
        %1666 = vmatpush1.bf16.msra.mxu0 0
        %1667 = vmatprep.subr.bf16.mxu0 0
        %1668 = vmatpush1.bf16.msra.mxu0 0
        %1669 = vmatprep.subr.bf16.mxu0 0
        %1670 = vmatpush1.bf16.msra.mxu0 0
        %1671 = vmatprep.subr.bf16.mxu0 0
        %1672 = vmatpush1.bf16.msra.mxu0 0
        %1673 = vmatprep.subr.bf16.mxu0 0
        %1674 = vmatpush1.bf16.msra.mxu0 0
        %1675 = vmatprep.subr.bf16.mxu0 0
        %1676 = vmatpush1.bf16.msra.mxu0 0
        %1677 = vmatprep.subr.bf16.mxu0 0
        %1678 = vmatpush1.bf16.msra.mxu0 0
        %1679 = vmatprep.subr.bf16.mxu0 0
        %1680 = vmatpush1.bf16.msra.mxu0 0
        %1681 = vmatprep.subr.bf16.mxu0 0
        %1682 = vmatpush1.bf16.msra.mxu0 0
        %1683 = vmatprep.subr.bf16.mxu0 0
        %1684 = vmatpush1.bf16.msra.mxu0 0
        %1685 = vmatprep.subr.bf16.mxu0 0
        %1686 = vmatpush1.bf16.msra.mxu0 0
        %1687 = vmatprep.subr.bf16.mxu0 0
        %1688 = vmatpush1.bf16.msra.mxu0 0
        %1689 = vmatprep.mubr.bf16.mxu0 0
        %1690 = vmatmul.mubr.bf16.gmra.mrb[0].mxu0 %v1466
        %v1691 = vpop.f32.mrb[0].mxu0
        %v1692 = vadd.f32 %v1450, %v1691
        %v1693 = vpop.f32.mrb[0].mxu0
        %v1694 = vpop.f32.mrb[0].mxu0
        %v1695 = vadd.f32 %v1450, %v1694
        %v1696 = vpop.f32.mrb[0].mxu0
        %1697 = vmatprep.mubr.bf16.mxu0 0
        %1698 = vmatmul.mubr.bf16.gmra.mrb[0].mxu0 %v1469
        %v1699 = vpop.f32.mrb[0].mxu0
        %v1700 = vadd.f32 %v1450, %v1699
        %v1701 = vpop.f32.mrb[0].mxu0
        %v1702 = vpop.f32.mrb[0].mxu0
        %v1703 = vadd.f32 %v1450, %v1702
        %v1704 = vpop.f32.mrb[0].mxu0
        %1705 = vmatprep.mubr.bf16.mxu0 0
        %1706 = vmatmul.mubr.bf16.gmra.mrb[0].mxu0 %v1472
        %v1707 = vpop.f32.mrb[0].mxu0
        %v1708 = vadd.f32 %v1450, %v1707
        %v1709 = vpop.f32.mrb[0].mxu0
        %v1710 = vpop.f32.mrb[0].mxu0
        %v1711 = vadd.f32 %v1450, %v1710
        %v1712 = vpop.f32.mrb[0].mxu0
        %1713 = vmatprep.mubr.bf16.mxu0 0
        %1714 = vmatmul.mubr.bf16.gmra.mrb[0].mxu0 %v1475
        %v1715 = vpop.f32.mrb[0].mxu0
        %v1716 = vadd.f32 %v1450, %v1715
        %v1717 = vpop.f32.mrb[0].mxu0
        %v1718 = vpop.f32.mrb[0].mxu0
        %v1719 = vadd.f32 %v1450, %v1718
        %v1720 = vpop.f32.mrb[0].mxu0
        %1721 = vmatprep.mubr.bf16.mxu0 0
        %1722 = vmatmul.mubr.bf16.gmra.mrb[0].mxu0 %v1478
        %v1723 = vpop.f32.mrb[0].mxu0
        %v1724 = vadd.f32 %v1450, %v1723
        %v1725 = vpop.f32.mrb[0].mxu0
        %v1726 = vpop.f32.mrb[0].mxu0
        %v1727 = vadd.f32 %v1450, %v1726
        %v1728 = vpop.f32.mrb[0].mxu0
        %1729 = vmatprep.mubr.bf16.mxu0 0
        %1730 = vmatmul.mubr.bf16.gmra.mrb[0].mxu0 %v1481
        %v1731 = vpop.f32.mrb[0].mxu0
        %v1732 = vadd.f32 %v1450, %v1731
        %v1733 = vpop.f32.mrb[0].mxu0
        %v1734 = vpop.f32.mrb[0].mxu0
        %v1735 = vadd.f32 %v1450, %v1734
        %v1736 = vpop.f32.mrb[0].mxu0
        %1737 = vmatprep.mubr.bf16.mxu0 0
        %1738 = vmatmul.mubr.bf16.gmra.mrb[0].mxu0 %v1484
        %v1739 = vpop.f32.mrb[0].mxu0
        %v1740 = vadd.f32 %v1450, %v1739
        %v1741 = vpop.f32.mrb[0].mxu0
        %v1742 = vpop.f32.mrb[0].mxu0
        %v1743 = vadd.f32 %v1450, %v1742
        %v1744 = vpop.f32.mrb[0].mxu0
        %1745 = vmatprep.mubr.bf16.mxu0 0
        %1746 = vmatmul.mubr.bf16.gmra.mrb[0].mxu0 %v1487
        %v1747 = vpop.f32.mrb[0].mxu0
        %v1748 = vadd.f32 %v1450, %v1747
        %v1749 = vpop.f32.mrb[0].mxu0
        %v1750 = vpop.f32.mrb[0].mxu0
        %v1751 = vadd.f32 %v1450, %v1750
        %v1752 = vpop.f32.mrb[0].mxu0
        %1753 = vmatprep.mubr.bf16.mxu0 0
        %1754 = vmatmul.mubr.bf16.gmra.mrb[0].mxu0 %v1490
        %v1755 = vpop.f32.mrb[0].mxu0
        %v1756 = vadd.f32 %v1450, %v1755
        %v1757 = vpop.f32.mrb[0].mxu0
        %v1758 = vpop.f32.mrb[0].mxu0
        %v1759 = vadd.f32 %v1450, %v1758
        %v1760 = vpop.f32.mrb[0].mxu0
        %1761 = vmatprep.mubr.bf16.mxu0 0
        %1762 = vmatmul.mubr.bf16.gmra.mrb[0].mxu0 %v1493
        %v1763 = vpop.f32.mrb[0].mxu0
        %v1764 = vadd.f32 %v1450, %v1763
        %v1765 = vpop.f32.mrb[0].mxu0
        %v1766 = vpop.f32.mrb[0].mxu0
        %v1767 = vadd.f32 %v1450, %v1766
        %v1768 = vpop.f32.mrb[0].mxu0
        %1769 = vmatprep.mubr.bf16.mxu0 0
        %1770 = vmatmul.mubr.bf16.gmra.mrb[0].mxu0 %v1496
        %v1771 = vpop.f32.mrb[0].mxu0
        %v1772 = vadd.f32 %v1450, %v1771
        %v1773 = vpop.f32.mrb[0].mxu0
        %v1774 = vpop.f32.mrb[0].mxu0
        %v1775 = vadd.f32 %v1450, %v1774
        %v1776 = vpop.f32.mrb[0].mxu0
        %1777 = vmatprep.mubr.bf16.mxu0 0
        %1778 = vmatmul.mubr.bf16.gmra.mrb[0].mxu0 %v1499
        %v1779 = vpop.f32.mrb[0].mxu0
        %v1780 = vadd.f32 %v1450, %v1779
        %v1781 = vpop.f32.mrb[0].mxu0
        %v1782 = vpop.f32.mrb[0].mxu0
        %v1783 = vadd.f32 %v1450, %v1782
        %v1784 = vpop.f32.mrb[0].mxu0
        %1785 = vmatprep.mubr.bf16.mxu0 0
        %1786 = vmatmul.mubr.bf16.gmra.mrb[0].mxu0 %v1502
        %v1787 = vpop.f32.mrb[0].mxu0
        %v1788 = vadd.f32 %v1450, %v1787
        %v1789 = vpop.f32.mrb[0].mxu0
        %v1790 = vpop.f32.mrb[0].mxu0
        %v1791 = vadd.f32 %v1450, %v1790
        %v1792 = vpop.f32.mrb[0].mxu0
        %1793 = vmatprep.mubr.bf16.mxu0 0
        %1794 = vmatmul.mubr.bf16.gmra.mrb[0].mxu0 %v1505
        %v1795 = vpop.f32.mrb[0].mxu0
        %v1796 = vadd.f32 %v1450, %v1795
        %v1797 = vpop.f32.mrb[0].mxu0
        %v1798 = vpop.f32.mrb[0].mxu0
        %v1799 = vadd.f32 %v1450, %v1798
        %v1800 = vpop.f32.mrb[0].mxu0
        %1801 = vmatprep.mubr.bf16.mxu0 0
        %1802 = vmatmul.mubr.bf16.gmra.mrb[0].mxu0 %v1508
        %v1803 = vpop.f32.mrb[0].mxu0
        %v1804 = vadd.f32 %v1450, %v1803
        %v1805 = vpop.f32.mrb[0].mxu0
        %v1806 = vpop.f32.mrb[0].mxu0
        %v1807 = vadd.f32 %v1450, %v1806
        %v1808 = vpop.f32.mrb[0].mxu0
        %1809 = vmatprep.mubr.bf16.mxu0 0
        %1810 = vmatmul.mubr.bf16.gmra.mrb[0].mxu0 %v1511
        %v1811 = vpop.f32.mrb[0].mxu0
        %v1812 = vadd.f32 %v1450, %v1811
        %v1813 = vpop.f32.mrb[0].mxu0
        %v1814 = vpop.f32.mrb[0].mxu0
        %v1815 = vadd.f32 %v1450, %v1814
        %v1816 = vpop.f32.mrb[0].mxu0
        %1817 = vmatprep.mubr.bf16.mxu0 0
        %1818 = vmatmul.mubr.bf16.gmra.mrb[0].mxu0 %v1514
        %v1819 = vpop.f32.mrb[0].mxu0
        %v1820 = vadd.f32 %v1450, %v1819
        %v1821 = vpop.f32.mrb[0].mxu0
        %v1822 = vpop.f32.mrb[0].mxu0
        %v1823 = vadd.f32 %v1450, %v1822
        %v1824 = vpop.f32.mrb[0].mxu0
        %1825 = vmatprep.mubr.bf16.mxu0 0
        %1826 = vmatmul.mubr.bf16.gmra.mrb[0].mxu0 %v1517
        %v1827 = vpop.f32.mrb[0].mxu0
        %v1828 = vadd.f32 %v1450, %v1827
        %v1829 = vpop.f32.mrb[0].mxu0
        %v1830 = vpop.f32.mrb[0].mxu0
        %v1831 = vadd.f32 %v1450, %v1830
        %v1832 = vpop.f32.mrb[0].mxu0
        %1833 = vmatprep.mubr.bf16.mxu0 0
        %1834 = vmatmul.mubr.bf16.gmra.mrb[0].mxu0 %v1520
        %v1835 = vpop.f32.mrb[0].mxu0
        %v1836 = vadd.f32 %v1450, %v1835
        %v1837 = vpop.f32.mrb[0].mxu0
        %v1838 = vpop.f32.mrb[0].mxu0
        %v1839 = vadd.f32 %v1450, %v1838
        %v1840 = vpop.f32.mrb[0].mxu0
        %1841 = vmatprep.mubr.bf16.mxu0 0
        %1842 = vmatmul.mubr.bf16.gmra.mrb[0].mxu0 %v1523
        %v1843 = vpop.f32.mrb[0].mxu0
        %v1844 = vadd.f32 %v1450, %v1843
        %v1845 = vpop.f32.mrb[0].mxu0
        %v1846 = vpop.f32.mrb[0].mxu0
        %v1847 = vadd.f32 %v1450, %v1846
        %v1848 = vpop.f32.mrb[0].mxu0
        %1849 = vmatprep.mubr.bf16.mxu0 0
        %1850 = vmatmul.mubr.bf16.gmra.mrb[0].mxu0 %v1526
        %v1851 = vpop.f32.mrb[0].mxu0
        %v1852 = vadd.f32 %v1450, %v1851
        %v1853 = vpop.f32.mrb[0].mxu0
        %v1854 = vpop.f32.mrb[0].mxu0
        %v1855 = vadd.f32 %v1450, %v1854
        %v1856 = vpop.f32.mrb[0].mxu0
        %1857 = vmatprep.mubr.bf16.mxu0 0
        %1858 = vmatmul.mubr.bf16.gmra.mrb[0].mxu0 %v1529
        %v1859 = vpop.f32.mrb[0].mxu0
        %v1860 = vadd.f32 %v1450, %v1859
        %v1861 = vpop.f32.mrb[0].mxu0
        %v1862 = vpop.f32.mrb[0].mxu0
        %v1863 = vadd.f32 %v1450, %v1862
        %v1864 = vpop.f32.mrb[0].mxu0
        %1865 = vmatprep.mubr.bf16.mxu0 0
        %1866 = vmatmul.mubr.bf16.gmra.mrb[0].mxu0 %v1532
        %v1867 = vpop.f32.mrb[0].mxu0
        %v1868 = vadd.f32 %v1450, %v1867
        %v1869 = vpop.f32.mrb[0].mxu0
        %v1870 = vpop.f32.mrb[0].mxu0
        %v1871 = vadd.f32 %v1450, %v1870
        %v1872 = vpop.f32.mrb[0].mxu0
        %1873 = vmatprep.mubr.bf16.mxu0 0
        %1874 = vmatmul.mubr.bf16.gmra.mrb[0].mxu0 %v1535
        %v1875 = vpop.f32.mrb[0].mxu0
        %v1876 = vadd.f32 %v1450, %v1875
        %v1877 = vpop.f32.mrb[0].mxu0
        %v1878 = vpop.f32.mrb[0].mxu0
        %v1879 = vadd.f32 %v1450, %v1878
        %v1880 = vpop.f32.mrb[0].mxu0
        %1881 = vmatprep.mubr.bf16.mxu0 0
        %1882 = vmatmul.mubr.bf16.gmra.mrb[0].mxu0 %v1538
        %v1883 = vpop.f32.mrb[0].mxu0
        %v1884 = vadd.f32 %v1450, %v1883
        %v1885 = vpop.f32.mrb[0].mxu0
        %v1886 = vpop.f32.mrb[0].mxu0
        %v1887 = vadd.f32 %v1450, %v1886
        %v1888 = vpop.f32.mrb[0].mxu0
        %1889 = vmatprep.mubr.bf16.mxu0 0
        %1890 = vmatmul.mubr.bf16.gmra.mrb[0].mxu0 %v1541
        %v1891 = vpop.f32.mrb[0].mxu0
        %v1892 = vadd.f32 %v1450, %v1891
        %v1893 = vpop.f32.mrb[0].mxu0
        %v1894 = vpop.f32.mrb[0].mxu0
        %v1895 = vadd.f32 %v1450, %v1894
        %v1896 = vpop.f32.mrb[0].mxu0
        %1897 = vmatprep.mubr.bf16.mxu0 0
        %1898 = vmatmul.mubr.bf16.gmra.mrb[0].mxu0 %v1544
        %v1899 = vpop.f32.mrb[0].mxu0
        %v1900 = vadd.f32 %v1450, %v1899
        %v1901 = vpop.f32.mrb[0].mxu0
        %v1902 = vpop.f32.mrb[0].mxu0
        %v1903 = vadd.f32 %v1450, %v1902
        %v1904 = vpop.f32.mrb[0].mxu0
        %1905 = vmatprep.mubr.bf16.mxu0 0
        %1906 = vmatmul.mubr.bf16.gmra.mrb[0].mxu0 %v1547
        %v1907 = vpop.f32.mrb[0].mxu0
        %v1908 = vadd.f32 %v1450, %v1907
        %v1909 = vpop.f32.mrb[0].mxu0
        %v1910 = vpop.f32.mrb[0].mxu0
        %v1911 = vadd.f32 %v1450, %v1910
        %v1912 = vpop.f32.mrb[0].mxu0
        %1913 = vmatprep.mubr.bf16.mxu0 0
        %1914 = vmatmul.mubr.bf16.gmra.mrb[0].mxu0 %v1550
        %v1915 = vpop.f32.mrb[0].mxu0
        %v1916 = vadd.f32 %v1450, %v1915
        %v1917 = vpop.f32.mrb[0].mxu0
        %v1918 = vpop.f32.mrb[0].mxu0
        %v1919 = vadd.f32 %v1450, %v1918
        %v1920 = vpop.f32.mrb[0].mxu0
        %1921 = vmatprep.mubr.bf16.mxu0 0
        %1922 = vmatmul.mubr.bf16.gmra.mrb[0].mxu0 %v1553
        %v1923 = vpop.f32.mrb[0].mxu0
        %v1924 = vadd.f32 %v1450, %v1923
        %v1925 = vpop.f32.mrb[0].mxu0
        %v1926 = vpop.f32.mrb[0].mxu0
        %v1927 = vadd.f32 %v1450, %v1926
        %v1928 = vpop.f32.mrb[0].mxu0
        %1929 = vmatprep.mubr.bf16.mxu0 0
        %1930 = vmatmul.mubr.bf16.gmra.mrb[0].mxu0 %v1556
        %v1931 = vpop.f32.mrb[0].mxu0
        %v1932 = vadd.f32 %v1450, %v1931
        %v1933 = vpop.f32.mrb[0].mxu0
        %v1934 = vpop.f32.mrb[0].mxu0
        %v1935 = vadd.f32 %v1450, %v1934
        %v1936 = vpop.f32.mrb[0].mxu0
        %1937 = vmatprep.mubr.bf16.mxu0 0
        %1938 = vmatmul.mubr.bf16.gmra.mrb[0].mxu0 %v1559
        %v1939 = vpop.f32.mrb[0].mxu0
        %v1940 = vadd.f32 %v1450, %v1939
        %v1941 = vpop.f32.mrb[0].mxu0
        %v1942 = vpop.f32.mrb[0].mxu0
        %v1943 = vadd.f32 %v1450, %v1942
        %v1944 = vpop.f32.mrb[0].mxu0
        %1945 = vmatprep.mubr.bf16.mxu0 0
        %1946 = vmatmul.mubr.bf16.gmra.mrb[0].mxu0 %v1562
        %v1947 = vpop.f32.mrb[0].mxu0
        %v1948 = vadd.f32 %v1450, %v1947
        %v1949 = vpop.f32.mrb[0].mxu0
        %v1950 = vpop.f32.mrb[0].mxu0
        %v1951 = vadd.f32 %v1450, %v1950
        %v1952 = vpop.f32.mrb[0].mxu0
        %1953 = vmatprep.mubr.bf16.mxu0 0
        %1954 = vmatmul.mubr.bf16.gmra.mrb[0].mxu0 %v1565
        %v1955 = vpop.f32.mrb[0].mxu0
        %v1956 = vadd.f32 %v1450, %v1955
        %v1957 = vpop.f32.mrb[0].mxu0
        %v1958 = vpop.f32.mrb[0].mxu0
        %v1959 = vadd.f32 %v1450, %v1958
        %v1960 = vpop.f32.mrb[0].mxu0
        %1961 = vmatprep.mubr.bf16.mxu0 0
        %1962 = vmatmul.mubr.bf16.gmra.mrb[0].mxu0 %v1568
        %v1963 = vpop.f32.mrb[0].mxu0
        %v1964 = vadd.f32 %v1450, %v1963
        %v1965 = vpop.f32.mrb[0].mxu0
        %v1966 = vpop.f32.mrb[0].mxu0
        %v1967 = vadd.f32 %v1450, %v1966
        %v1968 = vpop.f32.mrb[0].mxu0
        %1969 = vmatprep.mubr.bf16.mxu0 0
        %1970 = vmatmul.mubr.bf16.gmra.mrb[0].mxu0 %v1571
        %v1971 = vpop.f32.mrb[0].mxu0
        %v1972 = vadd.f32 %v1450, %v1971
        %v1973 = vpop.f32.mrb[0].mxu0
        %v1974 = vpop.f32.mrb[0].mxu0
        %v1975 = vadd.f32 %v1450, %v1974
        %v1976 = vpop.f32.mrb[0].mxu0
        %1977 = vmatprep.mubr.bf16.mxu0 0
        %1978 = vmatmul.mubr.bf16.gmra.mrb[0].mxu0 %v1574
        %v1979 = vpop.f32.mrb[0].mxu0
        %v1980 = vadd.f32 %v1450, %v1979
        %v1981 = vpop.f32.mrb[0].mxu0
        %v1982 = vpop.f32.mrb[0].mxu0
        %v1983 = vadd.f32 %v1450, %v1982
        %v1984 = vpop.f32.mrb[0].mxu0
        %1985 = vmatprep.mubr.bf16.mxu0 0
        %1986 = vmatmul.mubr.bf16.gmra.mrb[0].mxu0 %v1577
        %v1987 = vpop.f32.mrb[0].mxu0
        %v1988 = vadd.f32 %v1450, %v1987
        %v1989 = vpop.f32.mrb[0].mxu0
        %v1990 = vpop.f32.mrb[0].mxu0
        %v1991 = vadd.f32 %v1450, %v1990
        %v1992 = vpop.f32.mrb[0].mxu0
        %1993 = vmatprep.mubr.bf16.mxu0 0
        %1994 = vmatmul.mubr.bf16.gmra.mrb[0].mxu0 %v1580
        %v1995 = vpop.f32.mrb[0].mxu0
        %v1996 = vadd.f32 %v1450, %v1995
        %v1997 = vpop.f32.mrb[0].mxu0
        %v1998 = vpop.f32.mrb[0].mxu0
        %v1999 = vadd.f32 %v1450, %v1998
        %v2000 = vpop.f32.mrb[0].mxu0
        %2001 = vmatprep.mubr.bf16.mxu0 0
        %2002 = vmatmul.mubr.bf16.gmra.mrb[0].mxu0 %v1583
        %v2003 = vpop.f32.mrb[0].mxu0
        %v2004 = vadd.f32 %v1450, %v2003
        %v2005 = vpop.f32.mrb[0].mxu0
        %v2006 = vpop.f32.mrb[0].mxu0
        %v2007 = vadd.f32 %v1450, %v2006
        %v2008 = vpop.f32.mrb[0].mxu0
        %2009 = vmatprep.mubr.bf16.mxu0 0
        %2010 = vmatmul.mubr.bf16.gmra.mrb[0].mxu0 %v1586
        %v2011 = vpop.f32.mrb[0].mxu0
        %v2012 = vadd.f32 %v1450, %v2011
        %v2013 = vpop.f32.mrb[0].mxu0
        %v2014 = vpop.f32.mrb[0].mxu0
        %v2015 = vadd.f32 %v1450, %v2014
        %v2016 = vpop.f32.mrb[0].mxu0
        %2017 = vmatprep.mubr.bf16.mxu0 0
        %2018 = vmatmul.mubr.bf16.gmra.mrb[0].mxu0 %v1589
        %v2019 = vpop.f32.mrb[0].mxu0
        %v2020 = vadd.f32 %v1450, %v2019
        %v2021 = vpop.f32.mrb[0].mxu0
        %v2022 = vpop.f32.mrb[0].mxu0
        %v2023 = vadd.f32 %v1450, %v2022
        %v2024 = vpop.f32.mrb[0].mxu0
        %2025 = vmatprep.mubr.bf16.mxu0 0
        %2026 = vmatmul.mubr.bf16.gmra.mrb[0].mxu0 %v1592
        %v2027 = vpop.f32.mrb[0].mxu0
        %v2028 = vadd.f32 %v1450, %v2027
        %v2029 = vpop.f32.mrb[0].mxu0
        %v2030 = vpop.f32.mrb[0].mxu0
        %v2031 = vadd.f32 %v1450, %v2030
        %v2032 = vpop.f32.mrb[0].mxu0
        %2033 = vmatprep.mubr.bf16.mxu0 0
        %2034 = vmatmul.mubr.bf16.gmra.mrb[0].mxu0 %v1595
        %v2035 = vpop.f32.mrb[0].mxu0
        %v2036 = vadd.f32 %v1450, %v2035
        %v2037 = vpop.f32.mrb[0].mxu0
        %v2038 = vpop.f32.mrb[0].mxu0
        %v2039 = vadd.f32 %v1450, %v2038
        %v2040 = vpop.f32.mrb[0].mxu0
        %2041 = vmatprep.mubr.bf16.mxu0 0
        %2042 = vmatmul.mubr.bf16.gmra.mrb[0].mxu0 %v1598
        %v2043 = vpop.f32.mrb[0].mxu0
        %v2044 = vadd.f32 %v1450, %v2043
        %v2045 = vpop.f32.mrb[0].mxu0
        %v2046 = vpop.f32.mrb[0].mxu0
        %v2047 = vadd.f32 %v1450, %v2046
        %v2048 = vpop.f32.mrb[0].mxu0
        %2049 = vmatprep.mubr.bf16.mxu0 0
        %2050 = vmatmul.mubr.bf16.gmra.mrb[0].mxu0 %v1601
        %v2051 = vpop.f32.mrb[0].mxu0
        %v2052 = vadd.f32 %v1450, %v2051
        %v2053 = vpop.f32.mrb[0].mxu0
        %v2054 = vpop.f32.mrb[0].mxu0
        %v2055 = vadd.f32 %v1450, %v2054
        %v2056 = vpop.f32.mrb[0].mxu0
        %2057 = vmatprep.mubr.bf16.mxu0 0
        %2058 = vmatmul.mubr.bf16.gmra.mrb[0].mxu0 %v1604
        %v2059 = vpop.f32.mrb[0].mxu0
        %v2060 = vadd.f32 %v1450, %v2059
        %v2061 = vpop.f32.mrb[0].mxu0
        %v2062 = vpop.f32.mrb[0].mxu0
        %v2063 = vadd.f32 %v1450, %v2062
        %v2064 = vpop.f32.mrb[0].mxu0
        %2065 = vmatprep.mubr.bf16.mxu0 0
        %2066 = vmatmul.mubr.bf16.gmra.mrb[0].mxu0 %v1607
        %v2067 = vpop.f32.mrb[0].mxu0
        %v2068 = vadd.f32 %v1450, %v2067
        %v2069 = vpop.f32.mrb[0].mxu0
        %v2070 = vpop.f32.mrb[0].mxu0
        %v2071 = vadd.f32 %v1450, %v2070
        %v2072 = vpop.f32.mrb[0].mxu0
        %2073 = vmatprep.mubr.bf16.mxu0 0
        %2074 = vmatmul.mubr.bf16.gmra.mrb[0].mxu0 %v1610
        %v2075 = vpop.f32.mrb[0].mxu0
        %v2076 = vadd.f32 %v1450, %v2075
        %v2077 = vpop.f32.mrb[0].mxu0
        %v2078 = vpop.f32.mrb[0].mxu0
        %v2079 = vadd.f32 %v1450, %v2078
        %v2080 = vpop.f32.mrb[0].mxu0
        %2081 = vmatprep.mubr.bf16.mxu0 0
        %2082 = vmatmul.mubr.bf16.gmra.mrb[0].mxu0 %v1613
        %v2083 = vpop.f32.mrb[0].mxu0
        %v2084 = vadd.f32 %v1450, %v2083
        %v2085 = vpop.f32.mrb[0].mxu0
        %v2086 = vpop.f32.mrb[0].mxu0
        %v2087 = vadd.f32 %v1450, %v2086
        %v2088 = vpop.f32.mrb[0].mxu0
        %2089 = vmatprep.mubr.bf16.mxu0 0
        %2090 = vmatmul.mubr.bf16.gmra.mrb[0].mxu0 %v1616
        %v2091 = vpop.f32.mrb[0].mxu0
        %v2092 = vadd.f32 %v1450, %v2091
        %v2093 = vpop.f32.mrb[0].mxu0
        %v2094 = vpop.f32.mrb[0].mxu0
        %v2095 = vadd.f32 %v1450, %v2094
        %v2096 = vpop.f32.mrb[0].mxu0
        %2097 = vmatprep.mubr.bf16.mxu0 0
        %2098 = vmatmul.mubr.bf16.gmra.mrb[0].mxu0 %v1619
        %v2099 = vpop.f32.mrb[0].mxu0
        %v2100 = vadd.f32 %v1450, %v2099
        %v2101 = vpop.f32.mrb[0].mxu0
        %v2102 = vpop.f32.mrb[0].mxu0
        %v2103 = vadd.f32 %v1450, %v2102
        %v2104 = vpop.f32.mrb[0].mxu0
        %2105 = vmatprep.mubr.bf16.mxu0 0
        %2106 = vmatmul.mubr.bf16.gmra.mrb[0].mxu0 %v1622
        %v2107 = vpop.f32.mrb[0].mxu0
        %v2108 = vadd.f32 %v1450, %v2107
        %v2109 = vpop.f32.mrb[0].mxu0
        %v2110 = vpop.f32.mrb[0].mxu0
        %v2111 = vadd.f32 %v1450, %v2110
        %v2112 = vpop.f32.mrb[0].mxu0
        %2113 = vmatprep.mubr.bf16.mxu0 0
        %2114 = vmatmul.mubr.bf16.gmra.mrb[0].mxu0 %v1625
        %v2115 = vpop.f32.mrb[0].mxu0
        %v2116 = vadd.f32 %v1450, %v2115
        %v2117 = vpop.f32.mrb[0].mxu0
        %v2118 = vpop.f32.mrb[0].mxu0
        %v2119 = vadd.f32 %v1450, %v2118
        %v2120 = vpop.f32.mrb[0].mxu0
        %2121 = vmatprep.mubr.bf16.mxu0 0
        %2122 = vmatmul.mubr.bf16.gmra.mrb[0].mxu0 %v1628
        %v2123 = vpop.f32.mrb[0].mxu0
        %v2124 = vadd.f32 %v1450, %v2123
        %v2125 = vpop.f32.mrb[0].mxu0
        %v2126 = vpop.f32.mrb[0].mxu0
        %v2127 = vadd.f32 %v1450, %v2126
        %v2128 = vpop.f32.mrb[0].mxu0
        %2129 = vmatprep.mubr.bf16.mxu0 0
        %2130 = vmatmul.mubr.bf16.gmra.mrb[0].mxu0 %v1631
        %v2131 = vpop.f32.mrb[0].mxu0
        %v2132 = vadd.f32 %v1450, %v2131
        %v2133 = vpop.f32.mrb[0].mxu0
        %v2134 = vpop.f32.mrb[0].mxu0
        %v2135 = vadd.f32 %v1450, %v2134
        %v2136 = vpop.f32.mrb[0].mxu0
        %2137 = vmatprep.mubr.bf16.mxu0 0
        %2138 = vmatmul.mubr.bf16.gmra.mrb[0].mxu0 %v1634
        %v2139 = vpop.f32.mrb[0].mxu0
        %v2140 = vadd.f32 %v1450, %v2139
        %v2141 = vpop.f32.mrb[0].mxu0
        %v2142 = vpop.f32.mrb[0].mxu0
        %v2143 = vadd.f32 %v1450, %v2142
        %v2144 = vpop.f32.mrb[0].mxu0
        %2145 = vmatprep.mubr.bf16.mxu0 0
        %2146 = vmatmul.mubr.bf16.gmra.mrb[0].mxu0 %v1637
        %v2147 = vpop.f32.mrb[0].mxu0
        %v2148 = vadd.f32 %v1450, %v2147
        %v2149 = vpop.f32.mrb[0].mxu0
        %v2150 = vpop.f32.mrb[0].mxu0
        %v2151 = vadd.f32 %v1450, %v2150
        %v2152 = vpop.f32.mrb[0].mxu0
        %2153 = vmatprep.mubr.bf16.mxu0 0
        %2154 = vmatmul.mubr.bf16.gmra.mrb[0].mxu0 %v1640
        %v2155 = vpop.f32.mrb[0].mxu0
        %v2156 = vadd.f32 %v1450, %v2155
        %v2157 = vpop.f32.mrb[0].mxu0
        %v2158 = vpop.f32.mrb[0].mxu0
        %v2159 = vadd.f32 %v1450, %v2158
        %v2160 = vpop.f32.mrb[0].mxu0
        %2161 = vmatprep.mubr.bf16.mxu0 0
        %2162 = vmatmul.mubr.bf16.gmra.mrb[0].mxu0 %v1643
        %v2163 = vpop.f32.mrb[0].mxu0
        %v2164 = vadd.f32 %v1450, %v2163
        %v2165 = vpop.f32.mrb[0].mxu0
        %v2166 = vpop.f32.mrb[0].mxu0
        %v2167 = vadd.f32 %v1450, %v2166
        %v2168 = vpop.f32.mrb[0].mxu0
        %2169 = vmatprep.mubr.bf16.mxu0 0
        %2170 = vmatmul.mubr.bf16.gmra.mrb[0].mxu0 %v1646
        %v2171 = vpop.f32.mrb[0].mxu0
        %v2172 = vadd.f32 %v1450, %v2171
        %v2173 = vpop.f32.mrb[0].mxu0
        %v2174 = vpop.f32.mrb[0].mxu0
        %v2175 = vadd.f32 %v1450, %v2174
        %v2176 = vpop.f32.mrb[0].mxu0
        %2177 = vmatprep.mubr.bf16.mxu0 0
        %2178 = vmatmul.mubr.bf16.gmra.mrb[0].mxu0 %v1649
        %v2179 = vpop.f32.mrb[0].mxu0
        %v2180 = vadd.f32 %v1450, %v2179
        %v2181 = vpop.f32.mrb[0].mxu0
        %v2182 = vpop.f32.mrb[0].mxu0
        %v2183 = vadd.f32 %v1450, %v2182
        %v2184 = vpop.f32.mrb[0].mxu0
        %2185 = vmatprep.mubr.bf16.mxu0 0
        %2186 = vmatmul.mubr.bf16.gmra.mrb[0].mxu0 %v1652
        %v2187 = vpop.f32.mrb[0].mxu0
        %v2188 = vadd.f32 %v1450, %v2187
        %v2189 = vpop.f32.mrb[0].mxu0
        %v2190 = vpop.f32.mrb[0].mxu0
        %v2191 = vadd.f32 %v1450, %v2190
        %v2192 = vpop.f32.mrb[0].mxu0
        %2193 = vmatprep.mubr.bf16.mxu0 0
        %2194 = vmatmul.mubr.bf16.gmra.mrb[0].mxu0 %v1655
        %v2195 = vpop.f32.mrb[0].mxu0
        %v2196 = vadd.f32 %v1450, %v2195
        %v2197 = vpop.f32.mrb[0].mxu0
        %v2198 = vpop.f32.mrb[0].mxu0
        %v2199 = vadd.f32 %v1450, %v2198
        %v2200 = vpop.f32.mrb[0].mxu0
        %2201 = vdwg.mxu0
        %v2202 = vmax.f32 %v1692, 0.0
        %v2203 = vmax.f32 %v1695, 0.0
        %v2204 = vmax.f32 %v1700, 0.0
        %v2205 = vmax.f32 %v1703, 0.0
        %v2206 = vmax.f32 %v1708, 0.0
        %v2207 = vmax.f32 %v1711, 0.0
        %v2208 = vmax.f32 %v1716, 0.0
        %v2209 = vmax.f32 %v1719, 0.0
        %v2210 = vmax.f32 %v1724, 0.0
        %v2211 = vmax.f32 %v1727, 0.0
        %v2212 = vmax.f32 %v1732, 0.0
        %v2213 = vmax.f32 %v1735, 0.0
        %v2214 = vmax.f32 %v1740, 0.0
        %v2215 = vmax.f32 %v1743, 0.0
        %v2216 = vmax.f32 %v1748, 0.0
        %v2217 = vmax.f32 %v1751, 0.0
        %v2218 = vmax.f32 %v1756, 0.0
        %v2219 = vmax.f32 %v1759, 0.0
        %v2220 = vmax.f32 %v1764, 0.0
        %v2221 = vmax.f32 %v1767, 0.0
        %v2222 = vmax.f32 %v1772, 0.0
        %v2223 = vmax.f32 %v1775, 0.0
        %v2224 = vmax.f32 %v1780, 0.0
        %v2225 = vmax.f32 %v1783, 0.0
        %v2226 = vmax.f32 %v1788, 0.0
        %v2227 = vmax.f32 %v1791, 0.0
        %v2228 = vmax.f32 %v1796, 0.0
        %v2229 = vmax.f32 %v1799, 0.0
        %v2230 = vmax.f32 %v1804, 0.0
        %v2231 = vmax.f32 %v1807, 0.0
        %v2232 = vmax.f32 %v1812, 0.0
        %v2233 = vmax.f32 %v1815, 0.0
        %v2234 = vmax.f32 %v1820, 0.0
        %v2235 = vmax.f32 %v1823, 0.0
        %v2236 = vmax.f32 %v1828, 0.0
        %v2237 = vmax.f32 %v1831, 0.0
        %v2238 = vmax.f32 %v1836, 0.0
        %v2239 = vmax.f32 %v1839, 0.0
        %v2240 = vmax.f32 %v1844, 0.0
        %v2241 = vmax.f32 %v1847, 0.0
        %v2242 = vmax.f32 %v1852, 0.0
        %v2243 = vmax.f32 %v1855, 0.0
        %v2244 = vmax.f32 %v1860, 0.0
        %v2245 = vmax.f32 %v1863, 0.0
        %v2246 = vmax.f32 %v1868, 0.0
        %v2247 = vmax.f32 %v1871, 0.0
        %v2248 = vmax.f32 %v1876, 0.0
        %v2249 = vmax.f32 %v1879, 0.0
        %v2250 = vmax.f32 %v1884, 0.0
        %v2251 = vmax.f32 %v1887, 0.0
        %v2252 = vmax.f32 %v1892, 0.0
        %v2253 = vmax.f32 %v1895, 0.0
        %v2254 = vmax.f32 %v1900, 0.0
        %v2255 = vmax.f32 %v1903, 0.0
        %v2256 = vmax.f32 %v1908, 0.0
        %v2257 = vmax.f32 %v1911, 0.0
        %v2258 = vmax.f32 %v1916, 0.0
        %v2259 = vmax.f32 %v1919, 0.0
        %v2260 = vmax.f32 %v1924, 0.0
        %v2261 = vmax.f32 %v1927, 0.0
        %v2262 = vmax.f32 %v1932, 0.0
        %v2263 = vmax.f32 %v1935, 0.0
        %v2264 = vmax.f32 %v1940, 0.0
        %v2265 = vmax.f32 %v1943, 0.0
        %v2266 = vmax.f32 %v1948, 0.0
        %v2267 = vmax.f32 %v1951, 0.0
        %v2268 = vmax.f32 %v1956, 0.0
        %v2269 = vmax.f32 %v1959, 0.0
        %v2270 = vmax.f32 %v1964, 0.0
        %v2271 = vmax.f32 %v1967, 0.0
        %v2272 = vmax.f32 %v1972, 0.0
        %v2273 = vmax.f32 %v1975, 0.0
        %v2274 = vmax.f32 %v1980, 0.0
        %v2275 = vmax.f32 %v1983, 0.0
        %v2276 = vmax.f32 %v1988, 0.0
        %v2277 = vmax.f32 %v1991, 0.0
        %v2278 = vmax.f32 %v1996, 0.0
        %v2279 = vmax.f32 %v1999, 0.0
        %v2280 = vmax.f32 %v2004, 0.0
        %v2281 = vmax.f32 %v2007, 0.0
        %v2282 = vmax.f32 %v2012, 0.0
        %v2283 = vmax.f32 %v2015, 0.0
        %v2284 = vmax.f32 %v2020, 0.0
        %v2285 = vmax.f32 %v2023, 0.0
        %v2286 = vmax.f32 %v2028, 0.0
        %v2287 = vmax.f32 %v2031, 0.0
        %v2288 = vmax.f32 %v2036, 0.0
        %v2289 = vmax.f32 %v2039, 0.0
        %v2290 = vmax.f32 %v2044, 0.0
        %v2291 = vmax.f32 %v2047, 0.0
        %v2292 = vmax.f32 %v2052, 0.0
        %v2293 = vmax.f32 %v2055, 0.0
        %v2294 = vmax.f32 %v2060, 0.0
        %v2295 = vmax.f32 %v2063, 0.0
        %v2296 = vmax.f32 %v2068, 0.0
        %v2297 = vmax.f32 %v2071, 0.0
        %v2298 = vmax.f32 %v2076, 0.0
        %v2299 = vmax.f32 %v2079, 0.0
        %v2300 = vmax.f32 %v2084, 0.0
        %v2301 = vmax.f32 %v2087, 0.0
        %v2302 = vmax.f32 %v2092, 0.0
        %v2303 = vmax.f32 %v2095, 0.0
        %v2304 = vmax.f32 %v2100, 0.0
        %v2305 = vmax.f32 %v2103, 0.0
        %v2306 = vmax.f32 %v2108, 0.0
        %v2307 = vmax.f32 %v2111, 0.0
        %v2308 = vmax.f32 %v2116, 0.0
        %v2309 = vmax.f32 %v2119, 0.0
        %v2310 = vmax.f32 %v2124, 0.0
        %v2311 = vmax.f32 %v2127, 0.0
        %v2312 = vmax.f32 %v2132, 0.0
        %v2313 = vmax.f32 %v2135, 0.0
        %v2314 = vmax.f32 %v2140, 0.0
        %v2315 = vmax.f32 %v2143, 0.0
        %v2316 = vmax.f32 %v2148, 0.0
        %v2317 = vmax.f32 %v2151, 0.0
        %v2318 = vmax.f32 %v2156, 0.0
        %v2319 = vmax.f32 %v2159, 0.0
        %v2320 = vmax.f32 %v2164, 0.0
        %v2321 = vmax.f32 %v2167, 0.0
        %v2322 = vmax.f32 %v2172, 0.0
        %v2323 = vmax.f32 %v2175, 0.0
        %v2324 = vmax.f32 %v2180, 0.0
        %v2325 = vmax.f32 %v2183, 0.0
        %v2326 = vmax.f32 %v2188, 0.0
        %v2327 = vmax.f32 %v2191, 0.0
        %v2328 = vmax.f32 %v2196, 0.0
        %v2329 = vmax.f32 %v2199, 0.0
        %v2330 = vld [vmem:[%s423] sm:$0xff]
        %v2331 = vld [vmem:[%s423 + $0x8] sm:$0xff]
        %v2332 = vld [vmem:[%s423 + $0x10] sm:$0xff]
        %v2333 = vld [vmem:[%s423 + $0x18] sm:$0xff]
        %v2334 = vlaneseq
        %v2335 = vshrl.u32 %v2334, 7
        %v2336 = vsub.s32 0, %v2335
        %v2337 = vrot.slane %v2330, %v2336
        %2339 = vbcast.lane.b32.xlu0 %v2337, 256
        %v2340 = vpop.permute.xlu0 %2339
        %s2342 = sor.u32 256, 8
        %2343 = vbcast.lane.b32.xlu0 %v2337, %s2342
        %v2344 = vpop.permute.xlu0 %2343
        %s2346 = sor.u32 256, 16
        %2347 = vbcast.lane.b32.xlu0 %v2337, %s2346
        %v2348 = vpop.permute.xlu0 %2347
        %s2350 = sor.u32 256, 24
        %2351 = vbcast.lane.b32.xlu0 %v2337, %s2350
        %v2352 = vpop.permute.xlu0 %2351
        %v2353 = vlaneseq
        %v2354 = vshrl.u32 %v2353, 7
        %v2355 = vsub.s32 1, %v2354
        %v2356 = vrot.slane %v2330, %v2355
        %2358 = vbcast.lane.b32.xlu0 %v2356, 256
        %v2359 = vpop.permute.xlu0 %2358
        %s2361 = sor.u32 256, 8
        %2362 = vbcast.lane.b32.xlu0 %v2356, %s2361
        %v2363 = vpop.permute.xlu0 %2362
        %s2365 = sor.u32 256, 16
        %2366 = vbcast.lane.b32.xlu0 %v2356, %s2365
        %v2367 = vpop.permute.xlu0 %2366
        %s2369 = sor.u32 256, 24
        %2370 = vbcast.lane.b32.xlu0 %v2356, %s2369
        %v2371 = vpop.permute.xlu0 %2370
        %v2372 = vlaneseq
        %v2373 = vshrl.u32 %v2372, 7
        %v2374 = vsub.s32 2, %v2373
        %v2375 = vrot.slane %v2330, %v2374
        %2377 = vbcast.lane.b32.xlu0 %v2375, 256
        %v2378 = vpop.permute.xlu0 %2377
        %s2380 = sor.u32 256, 8
        %2381 = vbcast.lane.b32.xlu0 %v2375, %s2380
        %v2382 = vpop.permute.xlu0 %2381
        %s2384 = sor.u32 256, 16
        %2385 = vbcast.lane.b32.xlu0 %v2375, %s2384
        %v2386 = vpop.permute.xlu0 %2385
        %s2388 = sor.u32 256, 24
        %2389 = vbcast.lane.b32.xlu0 %v2375, %s2388
        %v2390 = vpop.permute.xlu0 %2389
        %v2391 = vlaneseq
        %v2392 = vshrl.u32 %v2391, 7
        %v2393 = vsub.s32 3, %v2392
        %v2394 = vrot.slane %v2330, %v2393
        %2396 = vbcast.lane.b32.xlu0 %v2394, 256
        %v2397 = vpop.permute.xlu0 %2396
        %s2399 = sor.u32 256, 8
        %2400 = vbcast.lane.b32.xlu0 %v2394, %s2399
        %v2401 = vpop.permute.xlu0 %2400
        %s2403 = sor.u32 256, 16
        %2404 = vbcast.lane.b32.xlu0 %v2394, %s2403
        %v2405 = vpop.permute.xlu0 %2404
        %s2407 = sor.u32 256, 24
        %2408 = vbcast.lane.b32.xlu0 %v2394, %s2407
        %v2409 = vpop.permute.xlu0 %2408
        %v2410 = vlaneseq
        %v2411 = vshrl.u32 %v2410, 7
        %v2412 = vsub.s32 4, %v2411
        %v2413 = vrot.slane %v2330, %v2412
        %2415 = vbcast.lane.b32.xlu0 %v2413, 256
        %v2416 = vpop.permute.xlu0 %2415
        %s2418 = sor.u32 256, 8
        %2419 = vbcast.lane.b32.xlu0 %v2413, %s2418
        %v2420 = vpop.permute.xlu0 %2419
        %s2422 = sor.u32 256, 16
        %2423 = vbcast.lane.b32.xlu0 %v2413, %s2422
        %v2424 = vpop.permute.xlu0 %2423
        %s2426 = sor.u32 256, 24
        %2427 = vbcast.lane.b32.xlu0 %v2413, %s2426
        %v2428 = vpop.permute.xlu0 %2427
        %v2429 = vlaneseq
        %v2430 = vshrl.u32 %v2429, 7
        %v2431 = vsub.s32 5, %v2430
        %v2432 = vrot.slane %v2330, %v2431
        %2434 = vbcast.lane.b32.xlu0 %v2432, 256
        %v2435 = vpop.permute.xlu0 %2434
        %s2437 = sor.u32 256, 8
        %2438 = vbcast.lane.b32.xlu0 %v2432, %s2437
        %v2439 = vpop.permute.xlu0 %2438
        %s2441 = sor.u32 256, 16
        %2442 = vbcast.lane.b32.xlu0 %v2432, %s2441
        %v2443 = vpop.permute.xlu0 %2442
        %s2445 = sor.u32 256, 24
        %2446 = vbcast.lane.b32.xlu0 %v2432, %s2445
        %v2447 = vpop.permute.xlu0 %2446
        %v2448 = vlaneseq
        %v2449 = vshrl.u32 %v2448, 7
        %v2450 = vsub.s32 6, %v2449
        %v2451 = vrot.slane %v2330, %v2450
        %2453 = vbcast.lane.b32.xlu0 %v2451, 256
        %v2454 = vpop.permute.xlu0 %2453
        %s2456 = sor.u32 256, 8
        %2457 = vbcast.lane.b32.xlu0 %v2451, %s2456
        %v2458 = vpop.permute.xlu0 %2457
        %s2460 = sor.u32 256, 16
        %2461 = vbcast.lane.b32.xlu0 %v2451, %s2460
        %v2462 = vpop.permute.xlu0 %2461
        %s2464 = sor.u32 256, 24
        %2465 = vbcast.lane.b32.xlu0 %v2451, %s2464
        %v2466 = vpop.permute.xlu0 %2465
        %v2467 = vlaneseq
        %v2468 = vshrl.u32 %v2467, 7
        %v2469 = vsub.s32 7, %v2468
        %v2470 = vrot.slane %v2330, %v2469
        %2472 = vbcast.lane.b32.xlu0 %v2470, 256
        %v2473 = vpop.permute.xlu0 %2472
        %s2475 = sor.u32 256, 8
        %2476 = vbcast.lane.b32.xlu0 %v2470, %s2475
        %v2477 = vpop.permute.xlu0 %2476
        %s2479 = sor.u32 256, 16
        %2480 = vbcast.lane.b32.xlu0 %v2470, %s2479
        %v2481 = vpop.permute.xlu0 %2480
        %s2483 = sor.u32 256, 24
        %2484 = vbcast.lane.b32.xlu0 %v2470, %s2483
        %v2485 = vpop.permute.xlu0 %2484
        %v2486 = vlaneseq
        %v2487 = vshrl.u32 %v2486, 7
        %v2488 = vsub.s32 0, %v2487
        %v2489 = vrot.slane %v2331, %v2488
        %2491 = vbcast.lane.b32.xlu0 %v2489, 256
        %v2492 = vpop.permute.xlu0 %2491
        %s2494 = sor.u32 256, 8
        %2495 = vbcast.lane.b32.xlu0 %v2489, %s2494
        %v2496 = vpop.permute.xlu0 %2495
        %s2498 = sor.u32 256, 16
        %2499 = vbcast.lane.b32.xlu0 %v2489, %s2498
        %v2500 = vpop.permute.xlu0 %2499
        %s2502 = sor.u32 256, 24
        %2503 = vbcast.lane.b32.xlu0 %v2489, %s2502
        %v2504 = vpop.permute.xlu0 %2503
        %v2505 = vlaneseq
        %v2506 = vshrl.u32 %v2505, 7
        %v2507 = vsub.s32 1, %v2506
        %v2508 = vrot.slane %v2331, %v2507
        %2510 = vbcast.lane.b32.xlu0 %v2508, 256
        %v2511 = vpop.permute.xlu0 %2510
        %s2513 = sor.u32 256, 8
        %2514 = vbcast.lane.b32.xlu0 %v2508, %s2513
        %v2515 = vpop.permute.xlu0 %2514
        %s2517 = sor.u32 256, 16
        %2518 = vbcast.lane.b32.xlu0 %v2508, %s2517
        %v2519 = vpop.permute.xlu0 %2518
        %s2521 = sor.u32 256, 24
        %2522 = vbcast.lane.b32.xlu0 %v2508, %s2521
        %v2523 = vpop.permute.xlu0 %2522
        %v2524 = vlaneseq
        %v2525 = vshrl.u32 %v2524, 7
        %v2526 = vsub.s32 2, %v2525
        %v2527 = vrot.slane %v2331, %v2526
        %2529 = vbcast.lane.b32.xlu0 %v2527, 256
        %v2530 = vpop.permute.xlu0 %2529
        %s2532 = sor.u32 256, 8
        %2533 = vbcast.lane.b32.xlu0 %v2527, %s2532
        %v2534 = vpop.permute.xlu0 %2533
        %s2536 = sor.u32 256, 16
        %2537 = vbcast.lane.b32.xlu0 %v2527, %s2536
        %v2538 = vpop.permute.xlu0 %2537
        %s2540 = sor.u32 256, 24
        %2541 = vbcast.lane.b32.xlu0 %v2527, %s2540
        %v2542 = vpop.permute.xlu0 %2541
        %v2543 = vlaneseq
        %v2544 = vshrl.u32 %v2543, 7
        %v2545 = vsub.s32 3, %v2544
        %v2546 = vrot.slane %v2331, %v2545
        %2548 = vbcast.lane.b32.xlu0 %v2546, 256
        %v2549 = vpop.permute.xlu0 %2548
        %s2551 = sor.u32 256, 8
        %2552 = vbcast.lane.b32.xlu0 %v2546, %s2551
        %v2553 = vpop.permute.xlu0 %2552
        %s2555 = sor.u32 256, 16
        %2556 = vbcast.lane.b32.xlu0 %v2546, %s2555
        %v2557 = vpop.permute.xlu0 %2556
        %s2559 = sor.u32 256, 24
        %2560 = vbcast.lane.b32.xlu0 %v2546, %s2559
        %v2561 = vpop.permute.xlu0 %2560
        %v2562 = vlaneseq
        %v2563 = vshrl.u32 %v2562, 7
        %v2564 = vsub.s32 4, %v2563
        %v2565 = vrot.slane %v2331, %v2564
        %2567 = vbcast.lane.b32.xlu0 %v2565, 256
        %v2568 = vpop.permute.xlu0 %2567
        %s2570 = sor.u32 256, 8
        %2571 = vbcast.lane.b32.xlu0 %v2565, %s2570
        %v2572 = vpop.permute.xlu0 %2571
        %s2574 = sor.u32 256, 16
        %2575 = vbcast.lane.b32.xlu0 %v2565, %s2574
        %v2576 = vpop.permute.xlu0 %2575
        %s2578 = sor.u32 256, 24
        %2579 = vbcast.lane.b32.xlu0 %v2565, %s2578
        %v2580 = vpop.permute.xlu0 %2579
        %v2581 = vlaneseq
        %v2582 = vshrl.u32 %v2581, 7
        %v2583 = vsub.s32 5, %v2582
        %v2584 = vrot.slane %v2331, %v2583
        %2586 = vbcast.lane.b32.xlu0 %v2584, 256
        %v2587 = vpop.permute.xlu0 %2586
        %s2589 = sor.u32 256, 8
        %2590 = vbcast.lane.b32.xlu0 %v2584, %s2589
        %v2591 = vpop.permute.xlu0 %2590
        %s2593 = sor.u32 256, 16
        %2594 = vbcast.lane.b32.xlu0 %v2584, %s2593
        %v2595 = vpop.permute.xlu0 %2594
        %s2597 = sor.u32 256, 24
        %2598 = vbcast.lane.b32.xlu0 %v2584, %s2597
        %v2599 = vpop.permute.xlu0 %2598
        %v2600 = vlaneseq
        %v2601 = vshrl.u32 %v2600, 7
        %v2602 = vsub.s32 6, %v2601
        %v2603 = vrot.slane %v2331, %v2602
        %2605 = vbcast.lane.b32.xlu0 %v2603, 256
        %v2606 = vpop.permute.xlu0 %2605
        %s2608 = sor.u32 256, 8
        %2609 = vbcast.lane.b32.xlu0 %v2603, %s2608
        %v2610 = vpop.permute.xlu0 %2609
        %s2612 = sor.u32 256, 16
        %2613 = vbcast.lane.b32.xlu0 %v2603, %s2612
        %v2614 = vpop.permute.xlu0 %2613
        %s2616 = sor.u32 256, 24
        %2617 = vbcast.lane.b32.xlu0 %v2603, %s2616
        %v2618 = vpop.permute.xlu0 %2617
        %v2619 = vlaneseq
        %v2620 = vshrl.u32 %v2619, 7
        %v2621 = vsub.s32 7, %v2620
        %v2622 = vrot.slane %v2331, %v2621
        %2624 = vbcast.lane.b32.xlu0 %v2622, 256
        %v2625 = vpop.permute.xlu0 %2624
        %s2627 = sor.u32 256, 8
        %2628 = vbcast.lane.b32.xlu0 %v2622, %s2627
        %v2629 = vpop.permute.xlu0 %2628
        %s2631 = sor.u32 256, 16
        %2632 = vbcast.lane.b32.xlu0 %v2622, %s2631
        %v2633 = vpop.permute.xlu0 %2632
        %s2635 = sor.u32 256, 24
        %2636 = vbcast.lane.b32.xlu0 %v2622, %s2635
        %v2637 = vpop.permute.xlu0 %2636
        %v2638 = vlaneseq
        %v2639 = vshrl.u32 %v2638, 7
        %v2640 = vsub.s32 0, %v2639
        %v2641 = vrot.slane %v2332, %v2640
        %2643 = vbcast.lane.b32.xlu0 %v2641, 256
        %v2644 = vpop.permute.xlu0 %2643
        %s2646 = sor.u32 256, 8
        %2647 = vbcast.lane.b32.xlu0 %v2641, %s2646
        %v2648 = vpop.permute.xlu0 %2647
        %s2650 = sor.u32 256, 16
        %2651 = vbcast.lane.b32.xlu0 %v2641, %s2650
        %v2652 = vpop.permute.xlu0 %2651
        %s2654 = sor.u32 256, 24
        %2655 = vbcast.lane.b32.xlu0 %v2641, %s2654
        %v2656 = vpop.permute.xlu0 %2655
        %v2657 = vlaneseq
        %v2658 = vshrl.u32 %v2657, 7
        %v2659 = vsub.s32 1, %v2658
        %v2660 = vrot.slane %v2332, %v2659
        %2662 = vbcast.lane.b32.xlu0 %v2660, 256
        %v2663 = vpop.permute.xlu0 %2662
        %s2665 = sor.u32 256, 8
        %2666 = vbcast.lane.b32.xlu0 %v2660, %s2665
        %v2667 = vpop.permute.xlu0 %2666
        %s2669 = sor.u32 256, 16
        %2670 = vbcast.lane.b32.xlu0 %v2660, %s2669
        %v2671 = vpop.permute.xlu0 %2670
        %s2673 = sor.u32 256, 24
        %2674 = vbcast.lane.b32.xlu0 %v2660, %s2673
        %v2675 = vpop.permute.xlu0 %2674
        %v2676 = vlaneseq
        %v2677 = vshrl.u32 %v2676, 7
        %v2678 = vsub.s32 2, %v2677
        %v2679 = vrot.slane %v2332, %v2678
        %2681 = vbcast.lane.b32.xlu0 %v2679, 256
        %v2682 = vpop.permute.xlu0 %2681
        %s2684 = sor.u32 256, 8
        %2685 = vbcast.lane.b32.xlu0 %v2679, %s2684
        %v2686 = vpop.permute.xlu0 %2685
        %s2688 = sor.u32 256, 16
        %2689 = vbcast.lane.b32.xlu0 %v2679, %s2688
        %v2690 = vpop.permute.xlu0 %2689
        %s2692 = sor.u32 256, 24
        %2693 = vbcast.lane.b32.xlu0 %v2679, %s2692
        %v2694 = vpop.permute.xlu0 %2693
        %v2695 = vlaneseq
        %v2696 = vshrl.u32 %v2695, 7
        %v2697 = vsub.s32 3, %v2696
        %v2698 = vrot.slane %v2332, %v2697
        %2700 = vbcast.lane.b32.xlu0 %v2698, 256
        %v2701 = vpop.permute.xlu0 %2700
        %s2703 = sor.u32 256, 8
        %2704 = vbcast.lane.b32.xlu0 %v2698, %s2703
        %v2705 = vpop.permute.xlu0 %2704
        %s2707 = sor.u32 256, 16
        %2708 = vbcast.lane.b32.xlu0 %v2698, %s2707
        %v2709 = vpop.permute.xlu0 %2708
        %s2711 = sor.u32 256, 24
        %2712 = vbcast.lane.b32.xlu0 %v2698, %s2711
        %v2713 = vpop.permute.xlu0 %2712
        %v2714 = vlaneseq
        %v2715 = vshrl.u32 %v2714, 7
        %v2716 = vsub.s32 4, %v2715
        %v2717 = vrot.slane %v2332, %v2716
        %2719 = vbcast.lane.b32.xlu0 %v2717, 256
        %v2720 = vpop.permute.xlu0 %2719
        %s2722 = sor.u32 256, 8
        %2723 = vbcast.lane.b32.xlu0 %v2717, %s2722
        %v2724 = vpop.permute.xlu0 %2723
        %s2726 = sor.u32 256, 16
        %2727 = vbcast.lane.b32.xlu0 %v2717, %s2726
        %v2728 = vpop.permute.xlu0 %2727
        %s2730 = sor.u32 256, 24
        %2731 = vbcast.lane.b32.xlu0 %v2717, %s2730
        %v2732 = vpop.permute.xlu0 %2731
        %v2733 = vlaneseq
        %v2734 = vshrl.u32 %v2733, 7
        %v2735 = vsub.s32 5, %v2734
        %v2736 = vrot.slane %v2332, %v2735
        %2738 = vbcast.lane.b32.xlu0 %v2736, 256
        %v2739 = vpop.permute.xlu0 %2738
        %s2741 = sor.u32 256, 8
        %2742 = vbcast.lane.b32.xlu0 %v2736, %s2741
        %v2743 = vpop.permute.xlu0 %2742
        %s2745 = sor.u32 256, 16
        %2746 = vbcast.lane.b32.xlu0 %v2736, %s2745
        %v2747 = vpop.permute.xlu0 %2746
        %s2749 = sor.u32 256, 24
        %2750 = vbcast.lane.b32.xlu0 %v2736, %s2749
        %v2751 = vpop.permute.xlu0 %2750
        %v2752 = vlaneseq
        %v2753 = vshrl.u32 %v2752, 7
        %v2754 = vsub.s32 6, %v2753
        %v2755 = vrot.slane %v2332, %v2754
        %2757 = vbcast.lane.b32.xlu0 %v2755, 256
        %v2758 = vpop.permute.xlu0 %2757
        %s2760 = sor.u32 256, 8
        %2761 = vbcast.lane.b32.xlu0 %v2755, %s2760
        %v2762 = vpop.permute.xlu0 %2761
        %s2764 = sor.u32 256, 16
        %2765 = vbcast.lane.b32.xlu0 %v2755, %s2764
        %v2766 = vpop.permute.xlu0 %2765
        %s2768 = sor.u32 256, 24
        %2769 = vbcast.lane.b32.xlu0 %v2755, %s2768
        %v2770 = vpop.permute.xlu0 %2769
        %v2771 = vlaneseq
        %v2772 = vshrl.u32 %v2771, 7
        %v2773 = vsub.s32 7, %v2772
        %v2774 = vrot.slane %v2332, %v2773
        %2776 = vbcast.lane.b32.xlu0 %v2774, 256
        %v2777 = vpop.permute.xlu0 %2776
        %s2779 = sor.u32 256, 8
        %2780 = vbcast.lane.b32.xlu0 %v2774, %s2779
        %v2781 = vpop.permute.xlu0 %2780
        %s2783 = sor.u32 256, 16
        %2784 = vbcast.lane.b32.xlu0 %v2774, %s2783
        %v2785 = vpop.permute.xlu0 %2784
        %s2787 = sor.u32 256, 24
        %2788 = vbcast.lane.b32.xlu0 %v2774, %s2787
        %v2789 = vpop.permute.xlu0 %2788
        %v2790 = vlaneseq
        %v2791 = vshrl.u32 %v2790, 7
        %v2792 = vsub.s32 0, %v2791
        %v2793 = vrot.slane %v2333, %v2792
        %2795 = vbcast.lane.b32.xlu0 %v2793, 256
        %v2796 = vpop.permute.xlu0 %2795
        %s2798 = sor.u32 256, 8
        %2799 = vbcast.lane.b32.xlu0 %v2793, %s2798
        %v2800 = vpop.permute.xlu0 %2799
        %s2802 = sor.u32 256, 16
        %2803 = vbcast.lane.b32.xlu0 %v2793, %s2802
        %v2804 = vpop.permute.xlu0 %2803
        %s2806 = sor.u32 256, 24
        %2807 = vbcast.lane.b32.xlu0 %v2793, %s2806
        %v2808 = vpop.permute.xlu0 %2807
        %v2809 = vlaneseq
        %v2810 = vshrl.u32 %v2809, 7
        %v2811 = vsub.s32 1, %v2810
        %v2812 = vrot.slane %v2333, %v2811
        %2814 = vbcast.lane.b32.xlu0 %v2812, 256
        %v2815 = vpop.permute.xlu0 %2814
        %s2817 = sor.u32 256, 8
        %2818 = vbcast.lane.b32.xlu0 %v2812, %s2817
        %v2819 = vpop.permute.xlu0 %2818
        %s2821 = sor.u32 256, 16
        %2822 = vbcast.lane.b32.xlu0 %v2812, %s2821
        %v2823 = vpop.permute.xlu0 %2822
        %s2825 = sor.u32 256, 24
        %2826 = vbcast.lane.b32.xlu0 %v2812, %s2825
        %v2827 = vpop.permute.xlu0 %2826
        %v2828 = vlaneseq
        %v2829 = vshrl.u32 %v2828, 7
        %v2830 = vsub.s32 2, %v2829
        %v2831 = vrot.slane %v2333, %v2830
        %2833 = vbcast.lane.b32.xlu0 %v2831, 256
        %v2834 = vpop.permute.xlu0 %2833
        %s2836 = sor.u32 256, 8
        %2837 = vbcast.lane.b32.xlu0 %v2831, %s2836
        %v2838 = vpop.permute.xlu0 %2837
        %s2840 = sor.u32 256, 16
        %2841 = vbcast.lane.b32.xlu0 %v2831, %s2840
        %v2842 = vpop.permute.xlu0 %2841
        %s2844 = sor.u32 256, 24
        %2845 = vbcast.lane.b32.xlu0 %v2831, %s2844
        %v2846 = vpop.permute.xlu0 %2845
        %v2847 = vlaneseq
        %v2848 = vshrl.u32 %v2847, 7
        %v2849 = vsub.s32 3, %v2848
        %v2850 = vrot.slane %v2333, %v2849
        %2852 = vbcast.lane.b32.xlu0 %v2850, 256
        %v2853 = vpop.permute.xlu0 %2852
        %s2855 = sor.u32 256, 8
        %2856 = vbcast.lane.b32.xlu0 %v2850, %s2855
        %v2857 = vpop.permute.xlu0 %2856
        %s2859 = sor.u32 256, 16
        %2860 = vbcast.lane.b32.xlu0 %v2850, %s2859
        %v2861 = vpop.permute.xlu0 %2860
        %s2863 = sor.u32 256, 24
        %2864 = vbcast.lane.b32.xlu0 %v2850, %s2863
        %v2865 = vpop.permute.xlu0 %2864
        %v2866 = vlaneseq
        %v2867 = vshrl.u32 %v2866, 7
        %v2868 = vsub.s32 4, %v2867
        %v2869 = vrot.slane %v2333, %v2868
        %2871 = vbcast.lane.b32.xlu0 %v2869, 256
        %v2872 = vpop.permute.xlu0 %2871
        %s2874 = sor.u32 256, 8
        %2875 = vbcast.lane.b32.xlu0 %v2869, %s2874
        %v2876 = vpop.permute.xlu0 %2875
        %s2878 = sor.u32 256, 16
        %2879 = vbcast.lane.b32.xlu0 %v2869, %s2878
        %v2880 = vpop.permute.xlu0 %2879
        %s2882 = sor.u32 256, 24
        %2883 = vbcast.lane.b32.xlu0 %v2869, %s2882
        %v2884 = vpop.permute.xlu0 %2883
        %v2885 = vlaneseq
        %v2886 = vshrl.u32 %v2885, 7
        %v2887 = vsub.s32 5, %v2886
        %v2888 = vrot.slane %v2333, %v2887
        %2890 = vbcast.lane.b32.xlu0 %v2888, 256
        %v2891 = vpop.permute.xlu0 %2890
        %s2893 = sor.u32 256, 8
        %2894 = vbcast.lane.b32.xlu0 %v2888, %s2893
        %v2895 = vpop.permute.xlu0 %2894
        %s2897 = sor.u32 256, 16
        %2898 = vbcast.lane.b32.xlu0 %v2888, %s2897
        %v2899 = vpop.permute.xlu0 %2898
        %s2901 = sor.u32 256, 24
        %2902 = vbcast.lane.b32.xlu0 %v2888, %s2901
        %v2903 = vpop.permute.xlu0 %2902
        %v2904 = vlaneseq
        %v2905 = vshrl.u32 %v2904, 7
        %v2906 = vsub.s32 6, %v2905
        %v2907 = vrot.slane %v2333, %v2906
        %2909 = vbcast.lane.b32.xlu0 %v2907, 256
        %v2910 = vpop.permute.xlu0 %2909
        %s2912 = sor.u32 256, 8
        %2913 = vbcast.lane.b32.xlu0 %v2907, %s2912
        %v2914 = vpop.permute.xlu0 %2913
        %s2916 = sor.u32 256, 16
        %2917 = vbcast.lane.b32.xlu0 %v2907, %s2916
        %v2918 = vpop.permute.xlu0 %2917
        %s2920 = sor.u32 256, 24
        %2921 = vbcast.lane.b32.xlu0 %v2907, %s2920
        %v2922 = vpop.permute.xlu0 %2921
        %v2923 = vlaneseq
        %v2924 = vshrl.u32 %v2923, 7
        %v2925 = vsub.s32 7, %v2924
        %v2926 = vrot.slane %v2333, %v2925
        %2928 = vbcast.lane.b32.xlu0 %v2926, 256
        %v2929 = vpop.permute.xlu0 %2928
        %s2931 = sor.u32 256, 8
        %2932 = vbcast.lane.b32.xlu0 %v2926, %s2931
        %v2933 = vpop.permute.xlu0 %2932
        %s2935 = sor.u32 256, 16
        %2936 = vbcast.lane.b32.xlu0 %v2926, %s2935
        %v2937 = vpop.permute.xlu0 %2936
        %s2939 = sor.u32 256, 24
        %2940 = vbcast.lane.b32.xlu0 %v2926, %s2939
        %v2941 = vpop.permute.xlu0 %2940
        %v2942 = vmul.f32 %v2202, %v2340
        %v2943 = vmul.f32 %v2203, %v2344
        %v2944 = vmul.f32 %v2204, %v2348
        %v2945 = vmul.f32 %v2205, %v2352
        %v2946 = vmul.f32 %v2206, %v2359
        %v2947 = vmul.f32 %v2207, %v2363
        %v2948 = vmul.f32 %v2208, %v2367
        %v2949 = vmul.f32 %v2209, %v2371
        %v2950 = vmul.f32 %v2210, %v2378
        %v2951 = vmul.f32 %v2211, %v2382
        %v2952 = vmul.f32 %v2212, %v2386
        %v2953 = vmul.f32 %v2213, %v2390
        %v2954 = vmul.f32 %v2214, %v2397
        %v2955 = vmul.f32 %v2215, %v2401
        %v2956 = vmul.f32 %v2216, %v2405
        %v2957 = vmul.f32 %v2217, %v2409
        %v2958 = vmul.f32 %v2218, %v2416
        %v2959 = vmul.f32 %v2219, %v2420
        %v2960 = vmul.f32 %v2220, %v2424
        %v2961 = vmul.f32 %v2221, %v2428
        %v2962 = vmul.f32 %v2222, %v2435
        %v2963 = vmul.f32 %v2223, %v2439
        %v2964 = vmul.f32 %v2224, %v2443
        %v2965 = vmul.f32 %v2225, %v2447
        %v2966 = vmul.f32 %v2226, %v2454
        %v2967 = vmul.f32 %v2227, %v2458
        %v2968 = vmul.f32 %v2228, %v2462
        %v2969 = vmul.f32 %v2229, %v2466
        %v2970 = vmul.f32 %v2230, %v2473
        %v2971 = vmul.f32 %v2231, %v2477
        %v2972 = vmul.f32 %v2232, %v2481
        %v2973 = vmul.f32 %v2233, %v2485
        %v2974 = vmul.f32 %v2234, %v2492
        %v2975 = vmul.f32 %v2235, %v2496
        %v2976 = vmul.f32 %v2236, %v2500
        %v2977 = vmul.f32 %v2237, %v2504
        %v2978 = vmul.f32 %v2238, %v2511
        %v2979 = vmul.f32 %v2239, %v2515
        %v2980 = vmul.f32 %v2240, %v2519
        %v2981 = vmul.f32 %v2241, %v2523
        %v2982 = vmul.f32 %v2242, %v2530
        %v2983 = vmul.f32 %v2243, %v2534
        %v2984 = vmul.f32 %v2244, %v2538
        %v2985 = vmul.f32 %v2245, %v2542
        %v2986 = vmul.f32 %v2246, %v2549
        %v2987 = vmul.f32 %v2247, %v2553
        %v2988 = vmul.f32 %v2248, %v2557
        %v2989 = vmul.f32 %v2249, %v2561
        %v2990 = vmul.f32 %v2250, %v2568
        %v2991 = vmul.f32 %v2251, %v2572
        %v2992 = vmul.f32 %v2252, %v2576
        %v2993 = vmul.f32 %v2253, %v2580
        %v2994 = vmul.f32 %v2254, %v2587
        %v2995 = vmul.f32 %v2255, %v2591
        %v2996 = vmul.f32 %v2256, %v2595
        %v2997 = vmul.f32 %v2257, %v2599
        %v2998 = vmul.f32 %v2258, %v2606
        %v2999 = vmul.f32 %v2259, %v2610
        %v3000 = vmul.f32 %v2260, %v2614
        %v3001 = vmul.f32 %v2261, %v2618
        %v3002 = vmul.f32 %v2262, %v2625
        %v3003 = vmul.f32 %v2263, %v2629
        %v3004 = vmul.f32 %v2264, %v2633
        %v3005 = vmul.f32 %v2265, %v2637
        %v3006 = vmul.f32 %v2266, %v2644
        %v3007 = vmul.f32 %v2267, %v2648
        %v3008 = vmul.f32 %v2268, %v2652
        %v3009 = vmul.f32 %v2269, %v2656
        %v3010 = vmul.f32 %v2270, %v2663
        %v3011 = vmul.f32 %v2271, %v2667
        %v3012 = vmul.f32 %v2272, %v2671
        %v3013 = vmul.f32 %v2273, %v2675
        %v3014 = vmul.f32 %v2274, %v2682
        %v3015 = vmul.f32 %v2275, %v2686
        %v3016 = vmul.f32 %v2276, %v2690
        %v3017 = vmul.f32 %v2277, %v2694
        %v3018 = vmul.f32 %v2278, %v2701
        %v3019 = vmul.f32 %v2279, %v2705
        %v3020 = vmul.f32 %v2280, %v2709
        %v3021 = vmul.f32 %v2281, %v2713
        %v3022 = vmul.f32 %v2282, %v2720
        %v3023 = vmul.f32 %v2283, %v2724
        %v3024 = vmul.f32 %v2284, %v2728
        %v3025 = vmul.f32 %v2285, %v2732
        %v3026 = vmul.f32 %v2286, %v2739
        %v3027 = vmul.f32 %v2287, %v2743
        %v3028 = vmul.f32 %v2288, %v2747
        %v3029 = vmul.f32 %v2289, %v2751
        %v3030 = vmul.f32 %v2290, %v2758
        %v3031 = vmul.f32 %v2291, %v2762
        %v3032 = vmul.f32 %v2292, %v2766
        %v3033 = vmul.f32 %v2293, %v2770
        %v3034 = vmul.f32 %v2294, %v2777
        %v3035 = vmul.f32 %v2295, %v2781
        %v3036 = vmul.f32 %v2296, %v2785
        %v3037 = vmul.f32 %v2297, %v2789
        %v3038 = vmul.f32 %v2298, %v2796
        %v3039 = vmul.f32 %v2299, %v2800
        %v3040 = vmul.f32 %v2300, %v2804
        %v3041 = vmul.f32 %v2301, %v2808
        %v3042 = vmul.f32 %v2302, %v2815
        %v3043 = vmul.f32 %v2303, %v2819
        %v3044 = vmul.f32 %v2304, %v2823
        %v3045 = vmul.f32 %v2305, %v2827
        %v3046 = vmul.f32 %v2306, %v2834
        %v3047 = vmul.f32 %v2307, %v2838
        %v3048 = vmul.f32 %v2308, %v2842
        %v3049 = vmul.f32 %v2309, %v2846
        %v3050 = vmul.f32 %v2310, %v2853
        %v3051 = vmul.f32 %v2311, %v2857
        %v3052 = vmul.f32 %v2312, %v2861
        %v3053 = vmul.f32 %v2313, %v2865
        %v3054 = vmul.f32 %v2314, %v2872
        %v3055 = vmul.f32 %v2315, %v2876
        %v3056 = vmul.f32 %v2316, %v2880
        %v3057 = vmul.f32 %v2317, %v2884
        %v3058 = vmul.f32 %v2318, %v2891
        %v3059 = vmul.f32 %v2319, %v2895
        %v3060 = vmul.f32 %v2320, %v2899
        %v3061 = vmul.f32 %v2321, %v2903
        %v3062 = vmul.f32 %v2322, %v2910
        %v3063 = vmul.f32 %v2323, %v2914
        %v3064 = vmul.f32 %v2324, %v2918
        %v3065 = vmul.f32 %v2325, %v2922
        %v3066 = vmul.f32 %v2326, %v2929
        %v3067 = vmul.f32 %v2327, %v2933
        %v3068 = vmul.f32 %v2328, %v2937
        %v3069 = vmul.f32 %v2329, %v2941
        %v3070 = vmax.f32 %v2942, %v2946
        %v3071 = vmax.f32 %v3070, %v2950
        %v3072 = vmax.f32 %v3071, %v2954
        %v3073 = vmax.f32 %v3072, %v2958
        %v3074 = vmax.f32 %v3073, %v2962
        %v3075 = vmax.f32 %v3074, %v2966
        %v3076 = vmax.f32 %v3075, %v2970
        %v3077 = vmax.f32 %v3076, %v2974
        %v3078 = vmax.f32 %v3077, %v2978
        %v3079 = vmax.f32 %v3078, %v2982
        %v3080 = vmax.f32 %v3079, %v2986
        %v3081 = vmax.f32 %v3080, %v2990
        %v3082 = vmax.f32 %v3081, %v2994
        %v3083 = vmax.f32 %v3082, %v2998
        %v3084 = vmax.f32 %v3083, %v3002
        %v3085 = vmax.f32 %v3084, %v3006
        %v3086 = vmax.f32 %v3085, %v3010
        %v3087 = vmax.f32 %v3086, %v3014
        %v3088 = vmax.f32 %v3087, %v3018
        %v3089 = vmax.f32 %v3088, %v3022
        %v3090 = vmax.f32 %v3089, %v3026
        %v3091 = vmax.f32 %v3090, %v3030
        %v3092 = vmax.f32 %v3091, %v3034
        %v3093 = vmax.f32 %v3092, %v3038
        %v3094 = vmax.f32 %v3093, %v3042
        %v3095 = vmax.f32 %v3094, %v3046
        %v3096 = vmax.f32 %v3095, %v3050
        %v3097 = vmax.f32 %v3096, %v3054
        %v3098 = vmax.f32 %v3097, %v3058
        %v3099 = vmax.f32 %v3098, %v3062
        %v3100 = vmax.f32 %v3099, %v3066
        %v3101 = vmax.f32 %v2943, %v2947
        %v3102 = vmax.f32 %v3101, %v2951
        %v3103 = vmax.f32 %v3102, %v2955
        %v3104 = vmax.f32 %v3103, %v2959
        %v3105 = vmax.f32 %v3104, %v2963
        %v3106 = vmax.f32 %v3105, %v2967
        %v3107 = vmax.f32 %v3106, %v2971
        %v3108 = vmax.f32 %v3107, %v2975
        %v3109 = vmax.f32 %v3108, %v2979
        %v3110 = vmax.f32 %v3109, %v2983
        %v3111 = vmax.f32 %v3110, %v2987
        %v3112 = vmax.f32 %v3111, %v2991
        %v3113 = vmax.f32 %v3112, %v2995
        %v3114 = vmax.f32 %v3113, %v2999
        %v3115 = vmax.f32 %v3114, %v3003
        %v3116 = vmax.f32 %v3115, %v3007
        %v3117 = vmax.f32 %v3116, %v3011
        %v3118 = vmax.f32 %v3117, %v3015
        %v3119 = vmax.f32 %v3118, %v3019
        %v3120 = vmax.f32 %v3119, %v3023
        %v3121 = vmax.f32 %v3120, %v3027
        %v3122 = vmax.f32 %v3121, %v3031
        %v3123 = vmax.f32 %v3122, %v3035
        %v3124 = vmax.f32 %v3123, %v3039
        %v3125 = vmax.f32 %v3124, %v3043
        %v3126 = vmax.f32 %v3125, %v3047
        %v3127 = vmax.f32 %v3126, %v3051
        %v3128 = vmax.f32 %v3127, %v3055
        %v3129 = vmax.f32 %v3128, %v3059
        %v3130 = vmax.f32 %v3129, %v3063
        %v3131 = vmax.f32 %v3130, %v3067
        %v3132 = vmax.f32 %v2944, %v2948
        %v3133 = vmax.f32 %v3132, %v2952
        %v3134 = vmax.f32 %v3133, %v2956
        %v3135 = vmax.f32 %v3134, %v2960
        %v3136 = vmax.f32 %v3135, %v2964
        %v3137 = vmax.f32 %v3136, %v2968
        %v3138 = vmax.f32 %v3137, %v2972
        %v3139 = vmax.f32 %v3138, %v2976
        %v3140 = vmax.f32 %v3139, %v2980
        %v3141 = vmax.f32 %v3140, %v2984
        %v3142 = vmax.f32 %v3141, %v2988
        %v3143 = vmax.f32 %v3142, %v2992
        %v3144 = vmax.f32 %v3143, %v2996
        %v3145 = vmax.f32 %v3144, %v3000
        %v3146 = vmax.f32 %v3145, %v3004
        %v3147 = vmax.f32 %v3146, %v3008
        %v3148 = vmax.f32 %v3147, %v3012
        %v3149 = vmax.f32 %v3148, %v3016
        %v3150 = vmax.f32 %v3149, %v3020
        %v3151 = vmax.f32 %v3150, %v3024
        %v3152 = vmax.f32 %v3151, %v3028
        %v3153 = vmax.f32 %v3152, %v3032
        %v3154 = vmax.f32 %v3153, %v3036
        %v3155 = vmax.f32 %v3154, %v3040
        %v3156 = vmax.f32 %v3155, %v3044
        %v3157 = vmax.f32 %v3156, %v3048
        %v3158 = vmax.f32 %v3157, %v3052
        %v3159 = vmax.f32 %v3158, %v3056
        %v3160 = vmax.f32 %v3159, %v3060
        %v3161 = vmax.f32 %v3160, %v3064
        %v3162 = vmax.f32 %v3161, %v3068
        %v3163 = vmax.f32 %v2945, %v2949
        %v3164 = vmax.f32 %v3163, %v2953
        %v3165 = vmax.f32 %v3164, %v2957
        %v3166 = vmax.f32 %v3165, %v2961
        %v3167 = vmax.f32 %v3166, %v2965
        %v3168 = vmax.f32 %v3167, %v2969
        %v3169 = vmax.f32 %v3168, %v2973
        %v3170 = vmax.f32 %v3169, %v2977
        %v3171 = vmax.f32 %v3170, %v2981
        %v3172 = vmax.f32 %v3171, %v2985
        %v3173 = vmax.f32 %v3172, %v2989
        %v3174 = vmax.f32 %v3173, %v2993
        %v3175 = vmax.f32 %v3174, %v2997
        %v3176 = vmax.f32 %v3175, %v3001
        %v3177 = vmax.f32 %v3176, %v3005
        %v3178 = vmax.f32 %v3177, %v3009
        %v3179 = vmax.f32 %v3178, %v3013
        %v3180 = vmax.f32 %v3179, %v3017
        %v3181 = vmax.f32 %v3180, %v3021
        %v3182 = vmax.f32 %v3181, %v3025
        %v3183 = vmax.f32 %v3182, %v3029
        %v3184 = vmax.f32 %v3183, %v3033
        %v3185 = vmax.f32 %v3184, %v3037
        %v3186 = vmax.f32 %v3185, %v3041
        %v3187 = vmax.f32 %v3186, %v3045
        %v3188 = vmax.f32 %v3187, %v3049
        %v3189 = vmax.f32 %v3188, %v3053
        %v3190 = vmax.f32 %v3189, %v3057
        %v3191 = vmax.f32 %v3190, %v3061
        %v3192 = vmax.f32 %v3191, %v3065
        %v3193 = vmax.f32 %v3192, %v3069
        %v3194 = vld [vmem:[%s396] sm:$0xff]
        %v3195 = vld [vmem:[%s396 + $0x8] sm:$0xff]
        %v3196 = vld [vmem:[%s396 + $0x10] sm:$0xff]
        %v3197 = vld [vmem:[%s396 + $0x18] sm:$0xff]
        %v3198 = vmax.f32 %v3194, %v3100
        %v3199 = vmax.f32 %v3195, %v3131
        %v3200 = vmax.f32 %v3196, %v3162
        %v3201 = vmax.f32 %v3197, %v3193
        %3202 = vst [vmem:[%s396] sm:$0xff] %v3198
        %3203 = vst [vmem:[%s396 + $0x8] sm:$0xff] %v3199
        %3204 = vst [vmem:[%s396 + $0x10] sm:$0xff] %v3200
        %3205 = vst [vmem:[%s396 + $0x18] sm:$0xff] %v3201
        %s3206 = sand.u32 %s254, 1
        %s3207 = scalar_lea.sflag [#allocation3], %s3206
        %s3208 = sand.u32 %s254, 1
        %s3209 = smul.addr %s3208, 32
        %s3210 = scalar_lea.vmem [#allocation2], %s3209
        // Predicated region
        $region61: #{tpu_custom_call.1} parent=55 // pred_check
          %p3211 = pneg %p264
        $region62: #{tpu_custom_call.1} parent=55 // pred_check_branch
          %3213 = sbr.rel (%p3211) target = $region64
        $region63: #{tpu_custom_call.1} parent=55 // pred_region
          %s3214 = smul.u32 4, %s27
          %s3216 = ssub.s32 512, 512
          %3217 = vsyncadd %s3207, %s3216
          %s3218 = smul.addr %s3214, 128
          %s3219 = scalar_lea.hbm %s9, %s3218
          %s3220 = sshll.u32 %s3210, 4
          %s3221 = int_to_ptr.vmem [resolvable:$true] %s3220
          %3226 = dma.vmem_to_hbm [thread:$0]  %s3221, 512, %s3219, %s3207, 128, 128, 8
        $region64: #{tpu_custom_call.1} parent=55 // pred_fallthru
          _
      $region56: #{tpu_custom_call.1} parent=5 // pred_fallthru
        _
      %p3227 = scmp.le.s32.totalorder 2, %s18
      // Predicated region
      $region65: #{tpu_custom_call.1} parent=5 // pred_check
        %p3228 = pneg %p3227
      $region66: #{tpu_custom_call.1} parent=5 // pred_check_branch
        %3230 = sbr.rel (%p3228) target = $region68
      $region67: #{tpu_custom_call.1} parent=5 // pred_region
        %s3231 = ssub.s32 %s18, 2
        // Predicated region
        $region69: #{tpu_custom_call.1} parent=67 // pred_check
          %p3232 = pneg %p270
        $region70: #{tpu_custom_call.1} parent=67 // pred_check_branch
          %3234 = sbr.rel (%p3232) target = $region72
        $region71: #{tpu_custom_call.1} parent=67 // pred_region
          %s3235 = sand.u32 %s255, 1
          %s3236 = scalar_lea.sflag [#allocation3], %s3235
          %s3237 = sand.u32 %s255, 1
          %s3238 = smul.addr %s3237, 32
          %s3239 = scalar_lea.vmem [#allocation2], %s3238
          %3240 = dma.done %s3236, 512
        $region72: #{tpu_custom_call.1} parent=67 // pred_fallthru
          _
      $region68: #{tpu_custom_call.1} parent=5 // pred_fallthru
        _
    $region6: #{tpu_custom_call.1} parent=1 // loop_footer
      %s22 = sadd.s32 1, %s18
    $region7: #{tpu_custom_call.1} parent=1 // loop_footer_branch
      %17 = sbr.rel target = $region3
    $region8: #{tpu_custom_call.1} parent=1 // loop_exit
      _
    %3241 = vsyncpa [#allocation3], 1
    %s3242 = scalar_lea.sflag [#allocation3], 1
    %3243 = vsyncpa %s3242, 1

</llo_original>
